<compile_context>
chip_gen: v7x
topology: tpu7x:2x2x1
jax: 0.10.0
libtpu: 0.0.40
codegen_flags: <defaults>
</compile_context>

<pallas_src>
import functools

import jax
import jax.numpy as jnp
import numpy as np
from jax import lax
from jax.experimental import pallas as pl
from jax.experimental.pallas import tpu as pltpu

EPS = 1e-5


# -------------------- kernel 1: BN1 + ReLU + 1x1 conv  (+ BN2 stat partials) --------------------
def _bn_relu_conv1x1_kernel(x_ref, s_ref, c_ref, w_ref, b_ref, y_ref, st_ref):
    # x_ref : (1, Cin, HW) f32      s_ref/c_ref : (Cin, 1) f32  (folded BN1 scale/shift)
    # w_ref : (C4, Cin)   f32       b_ref       : (C4, 1)  f32
    # y_ref : (1, C4, HW) bf16      st_ref      : (1, C4, 2) f32  (per-image sum / sumsq)
    z = jnp.maximum(x_ref[0] * s_ref[...] + c_ref[...], 0.0)            # BN1 + ReLU (f32)
    y = jnp.dot(w_ref[...], z, preferred_element_type=jnp.float32) + b_ref[...]  # (C4, HW)
    y_ref[0] = y.astype(y_ref.dtype)                                    # lane-dense bf16 store
    ssum = jnp.sum(y, axis=1, keepdims=True)                            # (C4, 1)
    ssq = jnp.sum(y * y, axis=1, keepdims=True)                         # (C4, 1)
    st_ref[0] = jnp.concatenate([ssum, ssq], axis=1)                    # (C4, 2)


def bn_relu_conv1x1(x_f, s1, c1, w1, b1):
    N, Cin, HW = x_f.shape
    C4 = w1.shape[0]
    return pl.pallas_call(
        _bn_relu_conv1x1_kernel,
        out_shape=(jax.ShapeDtypeStruct((N, C4, HW), jnp.bfloat16),
                   jax.ShapeDtypeStruct((N, C4, 2), jnp.float32)),
        grid_spec=pltpu.PrefetchScalarGridSpec(
            num_scalar_prefetch=0,
            grid=(N,),
            in_specs=[
                pl.BlockSpec((1, Cin, HW), lambda n: (n, 0, 0)),
                pl.BlockSpec((Cin, 1), lambda n: (0, 0)),
                pl.BlockSpec((Cin, 1), lambda n: (0, 0)),
                pl.BlockSpec((C4, Cin), lambda n: (0, 0)),
                pl.BlockSpec((C4, 1), lambda n: (0, 0)),
            ],
            out_specs=(
                pl.BlockSpec((1, C4, HW), lambda n: (n, 0, 0)),
                pl.BlockSpec((1, C4, 2), lambda n: (n, 0, 0)),
            ),
        ),
        compiler_params=pltpu.CompilerParams(dimension_semantics=("parallel",)),
    )(x_f, s1, c1, w1, b1)


# ------------- kernel 2: BN2 + ReLU + 3x3 conv (pad=1) + fused residual concat -------------
def _bn_relu_conv3x3_concat_kernel(W, y_ref, x_ref, s_ref, c_ref, m_ref, w_ref, b_ref, o_ref):
    # y_ref : (1, C4, HW) bf16        x_ref : (1, Cin, HW) f32 (residual, concatenated)
    # s_ref/c_ref : (C4, 1) f32       m_ref : (9, HW) f32 tap-validity masks (border zeros)
    # w_ref : (Cout, 9*C4) bf16       b_ref : (Cout, 1) f32
    # o_ref : (1, Cout+Cin, HW) f32
    HW = y_ref.shape[2]
    Cout = w_ref.shape[0]

    # BN2 + ReLU in f32.
    z = jnp.maximum(y_ref[0].astype(jnp.float32) * s_ref[...] + c_ref[...], 0.0)  # (C4, HW)
    m = m_ref[...]                                                                 # (9, HW)

    # Build im2col matrix with lane rolls (XLU) + masks; no padded scratch buffer.
    patches = []
    for dy in range(3):
        for dx in range(3):
            shift_pix = (dy - 1) * W + (dx - 1)
            r = z if shift_pix == 0 else pltpu.roll(z, shift=(-shift_pix) % HW, axis=1)
            k = dy * 3 + dx
            patches.append((r * m[k:k + 1, :]).astype(jnp.bfloat16))
    col = jnp.concatenate(patches, axis=0)                               # (9*C4, HW) bf16

    # Single K=9*C4 MXU matmul (f32 accumulation) + bias.
    y2 = jnp.dot(w_ref[...], col, preferred_element_type=jnp.float32) + b_ref[...]  # (Cout, HW)

    # Fused concat: [conv output ; residual input] along the channel (sublane) dim.
    o_ref[0, 0:Cout, :] = y2
    o_ref[0, Cout:, :] = x_ref[0]


def bn_relu_conv3x3_concat(y1, x_f, s2, c2, masks, w2f, b2, W):
    N, C4, HW = y1.shape
    Cin = x_f.shape[1]
    Cout = w2f.shape[0]
    kernel = functools.partial(_bn_relu_conv3x3_concat_kernel, W)
    return pl.pallas_call(
        kernel,
        out_shape=jax.ShapeDtypeStruct((N, Cout + Cin, HW), jnp.float32),
        grid_spec=pltpu.PrefetchScalarGridSpec(
            num_scalar_prefetch=0,
            grid=(N,),
            in_specs=[
                pl.BlockSpec((1, C4, HW), lambda n: (n, 0, 0)),
                pl.BlockSpec((1, Cin, HW), lambda n: (n, 0, 0)),
                pl.BlockSpec((C4, 1), lambda n: (0, 0)),
                pl.BlockSpec((C4, 1), lambda n: (0, 0)),
                pl.BlockSpec((9, HW), lambda n: (0, 0)),
                pl.BlockSpec((Cout, 9 * C4), lambda n: (0, 0)),
                pl.BlockSpec((Cout, 1), lambda n: (0, 0)),
            ],
            out_specs=pl.BlockSpec((1, Cout + Cin, HW), lambda n: (n, 0, 0)),
        ),
        compiler_params=pltpu.CompilerParams(dimension_semantics=("parallel",)),
    )(y1, x_f, s2, c2, masks, w2f, b2)


# ------------------------------------ module wrapper ---------------------------------------
def dense_bottleneck(x_nchw, p):
    """Equivalent of DenseBottleneck.forward. Input/output are NCHW like PyTorch."""
    x = x_nchw.astype(jnp.float32)
    N, Cin, H, W = x.shape
    HW = H * W
    C4 = p["w1"].shape[0]
    Cout = p["w2"].shape[0]

    xf = x.reshape(N, Cin, HW)                       # free reshape (NCHW is contiguous)

    # BN1 (training-mode batch stats, biased variance) folded into scale/shift (f32).
    m1 = xf.mean(axis=(0, 2))
    v1 = xf.var(axis=(0, 2))
    s1 = p["gamma1"] / jnp.sqrt(v1 + EPS)
    c1 = p["beta1"] - m1 * s1
    w1 = p["w1"][:, :, 0, 0]                         # (C4, Cin)

    y1, st = bn_relu_conv1x1(xf, s1[:, None], c1[:, None], w1, p["b1"][:, None])

    # BN2 batch stats from the kernel-1 partial sums (no HBM re-read of y1), f32.
    cnt = N * HW
    m2 = st[:, :, 0].sum(axis=0) / cnt
    v2 = st[:, :, 1].sum(axis=0) / cnt - m2 * m2     # biased variance
    s2 = p["gamma2"] / jnp.sqrt(v2 + EPS)
    c2 = p["beta2"] - m2 * s2

    # Static 3x3 tap-validity masks over the flattened pixel index (conv padding=1).
    hh = jnp.arange(H, dtype=jnp.int32)[:, None]
    ww = jnp.arange(W, dtype=jnp.int32)[None, :]
    mrows = []
    for dy in range(3):
        for dx in range(3):
            valid = ((hh + dy - 1 >= 0) & (hh + dy - 1 < H) &
                     (ww + dx - 1 >= 0) & (ww + dx - 1 < W))
            mrows.append(valid.reshape(HW).astype(jnp.float32))
    masks = jnp.stack(mrows, axis=0)                 # (9, HW)

    # im2col-folded 3x3 weights (Cout, 9*C4), bf16 for the MXU.
    w2f = jnp.transpose(p["w2"], (0, 2, 3, 1)).reshape(Cout, 9 * C4).astype(jnp.bfloat16)

    out = bn_relu_conv3x3_concat(y1, xf, s2[:, None], c2[:, None], masks, w2f,
                                 p["b2"][:, None], W)
    return out.reshape(N, Cout + Cin, H, W)          # free reshape back to NCHW


# ------------------------------------ pure-JAX reference -----------------------------------
def reference(x, p):
    m1 = x.mean(axis=(0, 2, 3), keepdims=True)
    v1 = x.var(axis=(0, 2, 3), keepdims=True)
    g1 = p["gamma1"].reshape(1, -1, 1, 1)
    b1 = p["beta1"].reshape(1, -1, 1, 1)
    a1 = jax.nn.relu((x - m1) / jnp.sqrt(v1 + EPS) * g1 + b1)
    y1 = lax.conv_general_dilated(a1, p["w1"], (1, 1), "VALID",
                                  dimension_numbers=("NCHW", "OIHW", "NCHW"))
    y1 = y1 + p["b1"].reshape(1, -1, 1, 1)
    m2 = y1.mean(axis=(0, 2, 3), keepdims=True)
    v2 = y1.var(axis=(0, 2, 3), keepdims=True)
    g2 = p["gamma2"].reshape(1, -1, 1, 1)
    b2 = p["beta2"].reshape(1, -1, 1, 1)
    a2 = jax.nn.relu((y1 - m2) / jnp.sqrt(v2 + EPS) * g2 + b2)
    y2 = lax.conv_general_dilated(a2, p["w2"], (1, 1), ((1, 1), (1, 1)),
                                  dimension_numbers=("NCHW", "OIHW", "NCHW"))
    y2 = y2 + p["b2"].reshape(1, -1, 1, 1)
    return jnp.concatenate([y2, x], axis=1)


if __name__ == "__main__":
    N, Cin, H, W = 2, 4, 16, 16
    out_ch = 8
    C4, Cout = 4 * out_ch, out_ch

    key = jax.random.PRNGKey(0)
    ks = jax.random.split(key, 9)
    params = {
        "gamma1": 0.5 + jax.random.uniform(ks[0], (Cin,), jnp.float32),
        "beta1": 0.1 * jax.random.normal(ks[1], (Cin,), jnp.float32),
        "w1": 0.1 * jax.random.normal(ks[2], (C4, Cin, 1, 1), jnp.float32),
        "b1": 0.1 * jax.random.normal(ks[3], (C4,), jnp.float32),
        "gamma2": 0.5 + jax.random.uniform(ks[4], (C4,), jnp.float32),
        "beta2": 0.1 * jax.random.normal(ks[5], (C4,), jnp.float32),
        "w2": 0.1 * jax.random.normal(ks[6], (Cout, C4, 3, 3), jnp.float32),
        "b2": 0.1 * jax.random.normal(ks[7], (Cout,), jnp.float32),
    }
    x = jax.random.normal(ks[8], (N, Cin, H, W), jnp.float32)

    fwd = jax.jit(dense_bottleneck)
    out = jax.block_until_ready(fwd(x, params))
    assert out.shape == (N, Cout + Cin, H, W), out.shape

    ref = jax.block_until_ready(reference(x, params))
    # bf16 MXU inputs in the 3x3 conv => compare at a bf16-appropriate tolerance.
    np.testing.assert_allclose(np.asarray(out), np.asarray(ref), rtol=2e-2, atol=2e-2)

    print("KERNEL_OK")
</pallas_src>

<mosaic_0001>
module attributes {stable_mosaic.version = 11 : i64} {
  func.func @_bn_relu_conv1x1_kernel(%arg0: i32, %arg1: memref<1x4x256xf32, #tpu.memory_space<vmem>>, %arg2: memref<4x1xf32, #tpu.memory_space<vmem>>, %arg3: memref<4x1xf32, #tpu.memory_space<vmem>>, %arg4: memref<32x4xf32, #tpu.memory_space<vmem>>, %arg5: memref<32x1xf32, #tpu.memory_space<vmem>>, %arg6: memref<1x32x256xbf16, #tpu.memory_space<vmem>>, %arg7: memref<1x32x2xf32, #tpu.memory_space<vmem>>) attributes {dimension_semantics = [#tpu.dimension_semantics<parallel>], iteration_bounds = array<i64: 2>, scalar_prefetch = 0 : i64, scratch_operands = 0 : i64, tpu.core_type = #tpu.core_type<tc>, window_params = [{transform_indices = @transform_0, window_bounds = array<i64: 1, 4, 256>}, {pipeline_mode = #tpu.pipeline_mode<synchronous>, transform_indices = @transform_1, window_bounds = array<i64: 4, 1>}, {pipeline_mode = #tpu.pipeline_mode<synchronous>, transform_indices = @transform_2, window_bounds = array<i64: 4, 1>}, {pipeline_mode = #tpu.pipeline_mode<synchronous>, transform_indices = @transform_3, window_bounds = array<i64: 32, 4>}, {pipeline_mode = #tpu.pipeline_mode<synchronous>, transform_indices = @transform_4, window_bounds = array<i64: 32, 1>}, {transform_indices = @transform_5, window_bounds = array<i64: 1, 32, 256>}, {transform_indices = @transform_6, window_bounds = array<i64: 1, 32, 2>}]} {
    %c0 = arith.constant 0 : index
    %c0_0 = arith.constant 0 : index
    %c0_1 = arith.constant 0 : index
    %0 = vector.load %arg1[%c0, %c0_0, %c0_1] : memref<1x4x256xf32, #tpu.memory_space<vmem>>, vector<1x4x256xf32>
    %1 = vector.shape_cast %0 : vector<1x4x256xf32> to vector<4x256xf32>
    %c0_2 = arith.constant 0 : index
    %c0_3 = arith.constant 0 : index
    %2 = vector.load %arg2[%c0_2, %c0_3] : memref<4x1xf32, #tpu.memory_space<vmem>>, vector<4x1xf32>
    %3 = vector.broadcast %2 : vector<4x1xf32> to vector<4x256xf32>
    %4 = arith.mulf %1, %3 : vector<4x256xf32>
    %c0_4 = arith.constant 0 : index
    %c0_5 = arith.constant 0 : index
    %5 = vector.load %arg3[%c0_4, %c0_5] : memref<4x1xf32, #tpu.memory_space<vmem>>, vector<4x1xf32>
    %6 = vector.broadcast %5 : vector<4x1xf32> to vector<4x256xf32>
    %7 = arith.addf %4, %6 : vector<4x256xf32>
    %cst = arith.constant 0.000000e+00 : f32
    %8 = vector.broadcast %cst : f32 to vector<4x256xf32>
    %9 = arith.maximumf %7, %8 : vector<4x256xf32>
    %c0_6 = arith.constant 0 : index
    %c0_7 = arith.constant 0 : index
    %10 = vector.load %arg4[%c0_6, %c0_7] : memref<32x4xf32, #tpu.memory_space<vmem>>, vector<32x4xf32>
    %cst_8 = arith.constant dense<0.000000e+00> : vector<32x256xf32>
    %11 = tpu.matmul %10, %9, %cst_8 {dimension_numbers = #tpu.dot_dimension_numbers<[1], [0], [0], [1], [0, 0, 1, 1], [], []>} : vector<32x4xf32>, vector<4x256xf32>, vector<32x256xf32> -> vector<32x256xf32>
    %c0_9 = arith.constant 0 : index
    %c0_10 = arith.constant 0 : index
    %12 = vector.load %arg5[%c0_9, %c0_10] : memref<32x1xf32, #tpu.memory_space<vmem>>, vector<32x1xf32>
    %13 = vector.broadcast %12 : vector<32x1xf32> to vector<32x256xf32>
    %14 = arith.addf %11, %13 : vector<32x256xf32>
    %15 = arith.truncf %14 : vector<32x256xf32> to vector<32x256xbf16>
    %c0_11 = arith.constant 0 : index
    %c0_12 = arith.constant 0 : index
    %c0_13 = arith.constant 0 : index
    %16 = vector.load %arg6[%c0_11, %c0_12, %c0_13] : memref<1x32x256xbf16, #tpu.memory_space<vmem>>, vector<1x32x256xbf16>
    %17 = vector.shape_cast %16 : vector<1x32x256xbf16> to vector<32x256xbf16>
    %18 = vector.shape_cast %15 : vector<32x256xbf16> to vector<1x32x256xbf16>
    tpu.vector_store %arg6[%c0_11, %c0_12, %c0_13], %18 {strides = array<i32>} : memref<1x32x256xbf16, #tpu.memory_space<vmem>>, vector<1x32x256xbf16>,
    %cst_14 = arith.constant dense<0.000000e+00> : vector<32xf32>
    %19 = vector.multi_reduction <add>, %14, %cst_14 [1] : vector<32x256xf32> to vector<32xf32>
    %20 = vector.shape_cast %19 : vector<32xf32> to vector<32x1xf32>
    %21 = arith.mulf %14, %14 : vector<32x256xf32>
    %cst_15 = arith.constant dense<0.000000e+00> : vector<32xf32>
    %22 = vector.multi_reduction <add>, %21, %cst_15 [1] : vector<32x256xf32> to vector<32xf32>
    %23 = vector.shape_cast %22 : vector<32xf32> to vector<32x1xf32>
    %24 = tpu.concatenate %20, %23 in 1 : vector<32x1xf32>, vector<32x1xf32> -> vector<32x2xf32>
    %c0_16 = arith.constant 0 : index
    %c0_17 = arith.constant 0 : index
    %c0_18 = arith.constant 0 : index
    %25 = vector.load %arg7[%c0_16, %c0_17, %c0_18] : memref<1x32x2xf32, #tpu.memory_space<vmem>>, vector<1x32x2xf32>
    %26 = vector.shape_cast %25 : vector<1x32x2xf32> to vector<32x2xf32>
    %27 = vector.shape_cast %24 : vector<32x2xf32> to vector<1x32x2xf32>
    tpu.vector_store %arg7[%c0_16, %c0_17, %c0_18], %27 {strides = array<i32>} : memref<1x32x2xf32, #tpu.memory_space<vmem>>, vector<1x32x2xf32>,
    return
  }
  func.func @transform_0(%arg0: i32) -> (i32, i32, i32) {
    %c0_i32 = arith.constant 0 : i32
    %c0_i32_0 = arith.constant 0 : i32
    %c0_i32_1 = arith.constant 0 : i32
    return %arg0, %c0_i32, %c0_i32_0 : i32, i32, i32
  }
  func.func @transform_1(%arg0: i32) -> (i32, i32) {
    %c0_i32 = arith.constant 0 : i32
    %c0_i32_0 = arith.constant 0 : i32
    %c0_i32_1 = arith.constant 0 : i32
    return %c0_i32, %c0_i32_0 : i32, i32
  }
  func.func @transform_2(%arg0: i32) -> (i32, i32) {
    %c0_i32 = arith.constant 0 : i32
    %c0_i32_0 = arith.constant 0 : i32
    %c0_i32_1 = arith.constant 0 : i32
    return %c0_i32, %c0_i32_0 : i32, i32
  }
  func.func @transform_3(%arg0: i32) -> (i32, i32) {
    %c0_i32 = arith.constant 0 : i32
    %c0_i32_0 = arith.constant 0 : i32
    %c0_i32_1 = arith.constant 0 : i32
    return %c0_i32, %c0_i32_0 : i32, i32
  }
  func.func @transform_4(%arg0: i32) -> (i32, i32) {
    %c0_i32 = arith.constant 0 : i32
    %c0_i32_0 = arith.constant 0 : i32
    %c0_i32_1 = arith.constant 0 : i32
    return %c0_i32, %c0_i32_0 : i32, i32
  }
  func.func @transform_5(%arg0: i32) -> (i32, i32, i32) {
    %c0_i32 = arith.constant 0 : i32
    %c0_i32_0 = arith.constant 0 : i32
    %c0_i32_1 = arith.constant 0 : i32
    return %arg0, %c0_i32, %c0_i32_0 : i32, i32, i32
  }
  func.func @transform_6(%arg0: i32) -> (i32, i32, i32) {
    %c0_i32 = arith.constant 0 : i32
    %c0_i32_0 = arith.constant 0 : i32
    %c0_i32_1 = arith.constant 0 : i32
    return %arg0, %c0_i32, %c0_i32_0 : i32, i32, i32
  }
}

module attributes {stable_mosaic.version = 11 : i64} {
  func.func @_bn_relu_conv3x3_concat_kernel(%arg0: i32, %arg1: memref<1x32x256xbf16, #tpu.memory_space<vmem>>, %arg2: memref<1x4x256xf32, #tpu.memory_space<vmem>>, %arg3: memref<32x1xf32, #tpu.memory_space<vmem>>, %arg4: memref<32x1xf32, #tpu.memory_space<vmem>>, %arg5: memref<9x256xf32, #tpu.memory_space<vmem>>, %arg6: memref<8x288xbf16, #tpu.memory_space<vmem>>, %arg7: memref<8x1xf32, #tpu.memory_space<vmem>>, %arg8: memref<1x12x256xf32, #tpu.memory_space<vmem>>) attributes {dimension_semantics = [#tpu.dimension_semantics<parallel>], iteration_bounds = array<i64: 2>, scalar_prefetch = 0 : i64, scratch_operands = 0 : i64, tpu.core_type = #tpu.core_type<tc>, window_params = [{transform_indices = @transform_0, window_bounds = array<i64: 1, 32, 256>}, {transform_indices = @transform_1, window_bounds = array<i64: 1, 4, 256>}, {pipeline_mode = #tpu.pipeline_mode<synchronous>, transform_indices = @transform_2, window_bounds = array<i64: 32, 1>}, {pipeline_mode = #tpu.pipeline_mode<synchronous>, transform_indices = @transform_3, window_bounds = array<i64: 32, 1>}, {pipeline_mode = #tpu.pipeline_mode<synchronous>, transform_indices = @transform_4, window_bounds = array<i64: 9, 256>}, {pipeline_mode = #tpu.pipeline_mode<synchronous>, transform_indices = @transform_5, window_bounds = array<i64: 8, 288>}, {pipeline_mode = #tpu.pipeline_mode<synchronous>, transform_indices = @transform_6, window_bounds = array<i64: 8, 1>}, {transform_indices = @transform_7, window_bounds = array<i64: 1, 12, 256>}]} {
    %c0 = arith.constant 0 : index
    %c0_0 = arith.constant 0 : index
    %c0_1 = arith.constant 0 : index
    %0 = vector.load %arg1[%c0, %c0_0, %c0_1] : memref<1x32x256xbf16, #tpu.memory_space<vmem>>, vector<1x32x256xbf16>
    %1 = vector.shape_cast %0 : vector<1x32x256xbf16> to vector<32x256xbf16>
    %2 = arith.extf %1 : vector<32x256xbf16> to vector<32x256xf32>
    %c0_2 = arith.constant 0 : index
    %c0_3 = arith.constant 0 : index
    %3 = vector.load %arg3[%c0_2, %c0_3] : memref<32x1xf32, #tpu.memory_space<vmem>>, vector<32x1xf32>
    %4 = vector.broadcast %3 : vector<32x1xf32> to vector<32x256xf32>
    %5 = arith.mulf %2, %4 : vector<32x256xf32>
    %c0_4 = arith.constant 0 : index
    %c0_5 = arith.constant 0 : index
    %6 = vector.load %arg4[%c0_4, %c0_5] : memref<32x1xf32, #tpu.memory_space<vmem>>, vector<32x1xf32>
    %7 = vector.broadcast %6 : vector<32x1xf32> to vector<32x256xf32>
    %8 = arith.addf %5, %7 : vector<32x256xf32>
    %cst = arith.constant 0.000000e+00 : f32
    %9 = vector.broadcast %cst : f32 to vector<32x256xf32>
    %10 = arith.maximumf %8, %9 : vector<32x256xf32>
    %c0_6 = arith.constant 0 : index
    %c0_7 = arith.constant 0 : index
    %11 = vector.load %arg5[%c0_6, %c0_7] : memref<9x256xf32, #tpu.memory_space<vmem>>, vector<9x256xf32>
    %c17_i32 = arith.constant 17 : i32
    %12 = tpu.dynamic_rotate %10 by %c17_i32 dim 1 : vector<32x256xf32>, i32 -> vector<32x256xf32>
    %13 = vector.extract_strided_slice %11 {offsets = [0, 0], sizes = [1, 256], strides = [1, 1]} : vector<9x256xf32> to vector<1x256xf32>
    %14 = vector.broadcast %13 : vector<1x256xf32> to vector<32x256xf32>
    %15 = arith.mulf %12, %14 : vector<32x256xf32>
    %16 = arith.truncf %15 : vector<32x256xf32> to vector<32x256xbf16>
    %c16_i32 = arith.constant 16 : i32
    %17 = tpu.dynamic_rotate %10 by %c16_i32 dim 1 : vector<32x256xf32>, i32 -> vector<32x256xf32>
    %18 = vector.extract_strided_slice %11 {offsets = [1, 0], sizes = [1, 256], strides = [1, 1]} : vector<9x256xf32> to vector<1x256xf32>
    %19 = vector.broadcast %18 : vector<1x256xf32> to vector<32x256xf32>
    %20 = arith.mulf %17, %19 : vector<32x256xf32>
    %21 = arith.truncf %20 : vector<32x256xf32> to vector<32x256xbf16>
    %c15_i32 = arith.constant 15 : i32
    %22 = tpu.dynamic_rotate %10 by %c15_i32 dim 1 : vector<32x256xf32>, i32 -> vector<32x256xf32>
    %23 = vector.extract_strided_slice %11 {offsets = [2, 0], sizes = [1, 256], strides = [1, 1]} : vector<9x256xf32> to vector<1x256xf32>
    %24 = vector.broadcast %23 : vector<1x256xf32> to vector<32x256xf32>
    %25 = arith.mulf %22, %24 : vector<32x256xf32>
    %26 = arith.truncf %25 : vector<32x256xf32> to vector<32x256xbf16>
    %c1_i32 = arith.constant 1 : i32
    %27 = tpu.dynamic_rotate %10 by %c1_i32 dim 1 : vector<32x256xf32>, i32 -> vector<32x256xf32>
    %28 = vector.extract_strided_slice %11 {offsets = [3, 0], sizes = [1, 256], strides = [1, 1]} : vector<9x256xf32> to vector<1x256xf32>
    %29 = vector.broadcast %28 : vector<1x256xf32> to vector<32x256xf32>
    %30 = arith.mulf %27, %29 : vector<32x256xf32>
    %31 = arith.truncf %30 : vector<32x256xf32> to vector<32x256xbf16>
    %32 = vector.extract_strided_slice %11 {offsets = [4, 0], sizes = [1, 256], strides = [1, 1]} : vector<9x256xf32> to vector<1x256xf32>
    %33 = vector.broadcast %32 : vector<1x256xf32> to vector<32x256xf32>
    %34 = arith.mulf %10, %33 : vector<32x256xf32>
    %35 = arith.truncf %34 : vector<32x256xf32> to vector<32x256xbf16>
    %c255_i32 = arith.constant 255 : i32
    %36 = tpu.dynamic_rotate %10 by %c255_i32 dim 1 : vector<32x256xf32>, i32 -> vector<32x256xf32>
    %37 = vector.extract_strided_slice %11 {offsets = [5, 0], sizes = [1, 256], strides = [1, 1]} : vector<9x256xf32> to vector<1x256xf32>
    %38 = vector.broadcast %37 : vector<1x256xf32> to vector<32x256xf32>
    %39 = arith.mulf %36, %38 : vector<32x256xf32>
    %40 = arith.truncf %39 : vector<32x256xf32> to vector<32x256xbf16>
    %c241_i32 = arith.constant 241 : i32
    %41 = tpu.dynamic_rotate %10 by %c241_i32 dim 1 : vector<32x256xf32>, i32 -> vector<32x256xf32>
    %42 = vector.extract_strided_slice %11 {offsets = [6, 0], sizes = [1, 256], strides = [1, 1]} : vector<9x256xf32> to vector<1x256xf32>
    %43 = vector.broadcast %42 : vector<1x256xf32> to vector<32x256xf32>
    %44 = arith.mulf %41, %43 : vector<32x256xf32>
    %45 = arith.truncf %44 : vector<32x256xf32> to vector<32x256xbf16>
    %c240_i32 = arith.constant 240 : i32
    %46 = tpu.dynamic_rotate %10 by %c240_i32 dim 1 : vector<32x256xf32>, i32 -> vector<32x256xf32>
    %47 = vector.extract_strided_slice %11 {offsets = [7, 0], sizes = [1, 256], strides = [1, 1]} : vector<9x256xf32> to vector<1x256xf32>
    %48 = vector.broadcast %47 : vector<1x256xf32> to vector<32x256xf32>
    %49 = arith.mulf %46, %48 : vector<32x256xf32>
    %50 = arith.truncf %49 : vector<32x256xf32> to vector<32x256xbf16>
    %c239_i32 = arith.constant 239 : i32
    %51 = tpu.dynamic_rotate %10 by %c239_i32 dim 1 : vector<32x256xf32>, i32 -> vector<32x256xf32>
    %52 = vector.extract_strided_slice %11 {offsets = [8, 0], sizes = [1, 256], strides = [1, 1]} : vector<9x256xf32> to vector<1x256xf32>
    %53 = vector.broadcast %52 : vector<1x256xf32> to vector<32x256xf32>
    %54 = arith.mulf %51, %53 : vector<32x256xf32>
    %55 = arith.truncf %54 : vector<32x256xf32> to vector<32x256xbf16>
    %56 = tpu.concatenate %16, %21, %26, %31, %35, %40, %45, %50, %55 in 0 : vector<32x256xbf16>, vector<32x256xbf16>, vector<32x256xbf16>, vector<32x256xbf16>, vector<32x256xbf16>, vector<32x256xbf16>, vector<32x256xbf16>, vector<32x256xbf16>, vector<32x256xbf16> -> vector<288x256xbf16>
    %c0_8 = arith.constant 0 : index
    %c0_9 = arith.constant 0 : index
    %57 = vector.load %arg6[%c0_8, %c0_9] : memref<8x288xbf16, #tpu.memory_space<vmem>>, vector<8x288xbf16>
    %cst_10 = arith.constant dense<0.000000e+00> : vector<8x256xf32>
    %58 = tpu.matmul %57, %56, %cst_10 {dimension_numbers = #tpu.dot_dimension_numbers<[1], [0], [0], [1], [0, 0, 1, 1], [], []>} : vector<8x288xbf16>, vector<288x256xbf16>, vector<8x256xf32> -> vector<8x256xf32>
    %c0_11 = arith.constant 0 : index
    %c0_12 = arith.constant 0 : index
    %59 = vector.load %arg7[%c0_11, %c0_12] : memref<8x1xf32, #tpu.memory_space<vmem>>, vector<8x1xf32>
    %60 = vector.broadcast %59 : vector<8x1xf32> to vector<8x256xf32>
    %61 = arith.addf %58, %60 : vector<8x256xf32>
    %c0_13 = arith.constant 0 : index
    %c0_14 = arith.constant 0 : index
    %c0_15 = arith.constant 0 : index
    %62 = vector.load %arg8[%c0_13, %c0_14, %c0_15] : memref<1x12x256xf32, #tpu.memory_space<vmem>>, vector<1x8x256xf32>
    %63 = vector.shape_cast %62 : vector<1x8x256xf32> to vector<8x256xf32>
    %64 = vector.shape_cast %61 : vector<8x256xf32> to vector<1x8x256xf32>
    tpu.vector_store %arg8[%c0_13, %c0_14, %c0_15], %64 {strides = array<i32>} : memref<1x12x256xf32, #tpu.memory_space<vmem>>, vector<1x8x256xf32>,
    %c0_16 = arith.constant 0 : index
    %c0_17 = arith.constant 0 : index
    %c0_18 = arith.constant 0 : index
    %65 = vector.load %arg2[%c0_16, %c0_17, %c0_18] : memref<1x4x256xf32, #tpu.memory_space<vmem>>, vector<1x4x256xf32>
    %66 = vector.shape_cast %65 : vector<1x4x256xf32> to vector<4x256xf32>
    %c0_19 = arith.constant 0 : index
    %c8 = arith.constant 8 : index
    %c0_20 = arith.constant 0 : index
    %67 = vector.load %arg8[%c0_19, %c8, %c0_20] : memref<1x12x256xf32, #tpu.memory_space<vmem>>, vector<1x4x256xf32>
    %68 = vector.shape_cast %67 : vector<1x4x256xf32> to vector<4x256xf32>
    %69 = vector.shape_cast %66 : vector<4x256xf32> to vector<1x4x256xf32>
    tpu.vector_store %arg8[%c0_19, %c8, %c0_20], %69 {strides = array<i32>} : memref<1x12x256xf32, #tpu.memory_space<vmem>>, vector<1x4x256xf32>,
    return
  }
  func.func @transform_0(%arg0: i32) -> (i32, i32, i32) {
    %c0_i32 = arith.constant 0 : i32
    %c0_i32_0 = arith.constant 0 : i32
    %c0_i32_1 = arith.constant 0 : i32
    return %arg0, %c0_i32, %c0_i32_0 : i32, i32, i32
  }
  func.func @transform_1(%arg0: i32) -> (i32, i32, i32) {
    %c0_i32 = arith.constant 0 : i32
    %c0_i32_0 = arith.constant 0 : i32
    %c0_i32_1 = arith.constant 0 : i32
    return %arg0, %c0_i32, %c0_i32_0 : i32, i32, i32
  }
  func.func @transform_2(%arg0: i32) -> (i32, i32) {
    %c0_i32 = arith.constant 0 : i32
    %c0_i32_0 = arith.constant 0 : i32
    %c0_i32_1 = arith.constant 0 : i32
    return %c0_i32, %c0_i32_0 : i32, i32
  }
  func.func @transform_3(%arg0: i32) -> (i32, i32) {
    %c0_i32 = arith.constant 0 : i32
    %c0_i32_0 = arith.constant 0 : i32
    %c0_i32_1 = arith.constant 0 : i32
    return %c0_i32, %c0_i32_0 : i32, i32
  }
  func.func @transform_4(%arg0: i32) -> (i32, i32) {
    %c0_i32 = arith.constant 0 : i32
    %c0_i32_0 = arith.constant 0 : i32
    %c0_i32_1 = arith.constant 0 : i32
    return %c0_i32, %c0_i32_0 : i32, i32
  }
  func.func @transform_5(%arg0: i32) -> (i32, i32) {
    %c0_i32 = arith.constant 0 : i32
    %c0_i32_0 = arith.constant 0 : i32
    %c0_i32_1 = arith.constant 0 : i32
    return %c0_i32, %c0_i32_0 : i32, i32
  }
  func.func @transform_6(%arg0: i32) -> (i32, i32) {
    %c0_i32 = arith.constant 0 : i32
    %c0_i32_0 = arith.constant 0 : i32
    %c0_i32_1 = arith.constant 0 : i32
    return %c0_i32, %c0_i32_0 : i32, i32
  }
  func.func @transform_7(%arg0: i32) -> (i32, i32, i32) {
    %c0_i32 = arith.constant 0 : i32
    %c0_i32_0 = arith.constant 0 : i32
    %c0_i32_1 = arith.constant 0 : i32
    return %arg0, %c0_i32, %c0_i32_0 : i32, i32, i32
  }
}

</mosaic_0001>

<llo_original>
// kernel: dense_bottleneck.2
$region0: #{dense_bottleneck.2}
  #allocation0 [shape = 'u32[]', space=smem, size = 0x4, offset = 0x4, fixed_abs, tag = 'smem constant byte address 0x4 - core index']
  #allocation1 [shape = 'u32[144,128]{1,0:T(1,128)}', space=vmem, size = 0x12000, scoped, tag = 'internal scratch']
  %s0 = inlined_call_operand.vmem [shape: f32[2,4,256], index: 0, kind: input, shape index: {}]
  %s1 = inlined_call_operand.vmem [shape: f32[4,1], index: 1, kind: input, shape index: {}]
  %s2 = inlined_call_operand.vmem [shape: f32[4,1], index: 2, kind: input, shape index: {}]
  %s3 = inlined_call_operand.vmem [shape: f32[32,4], index: 3, kind: input, shape index: {}]
  %s4 = inlined_call_operand.vmem [shape: f32[32,1], index: 4, kind: input, shape index: {}]
  %s5 = inlined_call_operand.vmem [shape: bf16[2,32,256], index: 5, kind: output, shape index: {0}]
  %s6 = inlined_call_operand.vmem [shape: f32[2,32,2], index: 6, kind: output, shape index: {1}]
  %7 = xla_tuple %s5, %s6
  %s8 = sld [smem:[#allocation0]]
  $region61: #{dense_bottleneck.2} parent=0
    _
  %s10 = ssub.s32 1, %s8
  %s11 = scalar_select 0, %s10, %s8
  loop: start=0, step=1, limit=4
  $region2: #{dense_bottleneck.2} parent=0 // loop_pre_header
    _
  $region3: #{dense_bottleneck.2} parent=0 // loop_header
    %s13 = sphi 0, %s17
    %p14 = scmp.ge.s32.totalorder %s13, 4
    %s23 = sphi 0, %s25
    %s26 = sphi 0, %s23
    %s27 = sphi 0, %s26
    %s43 = sphi 0, %s27
    %s47 = sphi 0, %s47
    %s49 = sphi 0, %s47
    %s50 = sphi 0, %s49
    %s64 = sphi 0, %s50
    %s68 = sphi 0, %s68
    %s70 = sphi 0, %s68
    %s71 = sphi 0, %s70
    %s85 = sphi 0, %s71
    %s89 = sphi 0, %s89
    %s91 = sphi 0, %s89
    %s92 = sphi 0, %s91
    %s106 = sphi 0, %s92
    %s110 = sphi 0, %s110
    %s112 = sphi 0, %s110
    %s113 = sphi 0, %s112
    %s127 = sphi 0, %s113
    %s133 = sphi 0, %s135
    %s136 = sphi 0, %s133
    %s137 = sphi 0, %s136
    %s153 = sphi 0, %s137
    %s159 = sphi 0, %s161
    %s162 = sphi 0, %s159
    %s163 = sphi 0, %s162
    %s179 = sphi 0, %s163
  $region4: #{dense_bottleneck.2} parent=0 // loop_header_branch
    %16 = sbr.rel (%p14) target = $region8
  $region5: #{dense_bottleneck.2} parent=0 // loop_body
    %s18 = ssub.s32 %s13, 1
    %s19 = ssub.s32 %s13, 2
    %s20 = sadd.s32 %s13, 1
    %s21 = ssub.s32 %s13, %s20
    %p22 = scmp.eq.s32.totalorder %s21, 0
    %s24 = sadd.s32 %s23, 1
    %s25 = scalar_select %p22, %s23, %s24
    %p28 = pneg %p22
    %p29 = scmp.eq.s32.totalorder %s13, 1
    %p30 = por %p28, %p29
    %p31 = scmp.ne.s32.totalorder %s23, %s26
    %p32 = scmp.eq.s32.totalorder %s13, 0
    %p33 = por %p31, %p32
    %p34 = scmp.ne.s32.totalorder %s23, %s26
    %p35 = scmp.eq.s32.totalorder %s18, 1
    %p36 = por %p34, %p35
    %p37 = scmp.ne.s32.totalorder %s26, %s27
    %p38 = scmp.eq.s32.totalorder %s18, 0
    %p39 = por %p37, %p38
    %p40 = scmp.ne.s32.totalorder %s26, %s27
    %p41 = scmp.eq.s32.totalorder %s19, 1
    %p42 = por %p40, %p41
    %p44 = scmp.ne.s32.totalorder %s27, %s43
    %p45 = scmp.eq.s32.totalorder %s19, 0
    %p46 = por %p44, %p45
    %s48 = sadd.s32 %s47, 1
    %p51 = scmp.eq.s32.totalorder %s13, 1
    %p52 = scmp.ne.s32.totalorder %s47, %s49
    %p53 = scmp.eq.s32.totalorder %s13, 0
    %p54 = por %p52, %p53
    %p55 = scmp.ne.s32.totalorder %s47, %s49
    %p56 = scmp.eq.s32.totalorder %s18, 1
    %p57 = por %p55, %p56
    %p58 = scmp.ne.s32.totalorder %s49, %s50
    %p59 = scmp.eq.s32.totalorder %s18, 0
    %p60 = por %p58, %p59
    %p61 = scmp.ne.s32.totalorder %s49, %s50
    %p62 = scmp.eq.s32.totalorder %s19, 1
    %p63 = por %p61, %p62
    %p65 = scmp.ne.s32.totalorder %s50, %s64
    %p66 = scmp.eq.s32.totalorder %s19, 0
    %p67 = por %p65, %p66
    %s69 = sadd.s32 %s68, 1
    %p72 = scmp.eq.s32.totalorder %s13, 1
    %p73 = scmp.ne.s32.totalorder %s68, %s70
    %p74 = scmp.eq.s32.totalorder %s13, 0
    %p75 = por %p73, %p74
    %p76 = scmp.ne.s32.totalorder %s68, %s70
    %p77 = scmp.eq.s32.totalorder %s18, 1
    %p78 = por %p76, %p77
    %p79 = scmp.ne.s32.totalorder %s70, %s71
    %p80 = scmp.eq.s32.totalorder %s18, 0
    %p81 = por %p79, %p80
    %p82 = scmp.ne.s32.totalorder %s70, %s71
    %p83 = scmp.eq.s32.totalorder %s19, 1
    %p84 = por %p82, %p83
    %p86 = scmp.ne.s32.totalorder %s71, %s85
    %p87 = scmp.eq.s32.totalorder %s19, 0
    %p88 = por %p86, %p87
    %s90 = sadd.s32 %s89, 1
    %p93 = scmp.eq.s32.totalorder %s13, 1
    %p94 = scmp.ne.s32.totalorder %s89, %s91
    %p95 = scmp.eq.s32.totalorder %s13, 0
    %p96 = por %p94, %p95
    %p97 = scmp.ne.s32.totalorder %s89, %s91
    %p98 = scmp.eq.s32.totalorder %s18, 1
    %p99 = por %p97, %p98
    %p100 = scmp.ne.s32.totalorder %s91, %s92
    %p101 = scmp.eq.s32.totalorder %s18, 0
    %p102 = por %p100, %p101
    %p103 = scmp.ne.s32.totalorder %s91, %s92
    %p104 = scmp.eq.s32.totalorder %s19, 1
    %p105 = por %p103, %p104
    %p107 = scmp.ne.s32.totalorder %s92, %s106
    %p108 = scmp.eq.s32.totalorder %s19, 0
    %p109 = por %p107, %p108
    %s111 = sadd.s32 %s110, 1
    %p114 = scmp.eq.s32.totalorder %s13, 1
    %p115 = scmp.ne.s32.totalorder %s110, %s112
    %p116 = scmp.eq.s32.totalorder %s13, 0
    %p117 = por %p115, %p116
    %p118 = scmp.ne.s32.totalorder %s110, %s112
    %p119 = scmp.eq.s32.totalorder %s18, 1
    %p120 = por %p118, %p119
    %p121 = scmp.ne.s32.totalorder %s112, %s113
    %p122 = scmp.eq.s32.totalorder %s18, 0
    %p123 = por %p121, %p122
    %p124 = scmp.ne.s32.totalorder %s112, %s113
    %p125 = scmp.eq.s32.totalorder %s19, 1
    %p126 = por %p124, %p125
    %p128 = scmp.ne.s32.totalorder %s113, %s127
    %p129 = scmp.eq.s32.totalorder %s19, 0
    %p130 = por %p128, %p129
    %s131 = ssub.s32 %s13, %s20
    %p132 = scmp.eq.s32.totalorder %s131, 0
    %s134 = sadd.s32 %s133, 1
    %s135 = scalar_select %p132, %s133, %s134
    %p138 = pneg %p132
    %p139 = scmp.eq.s32.totalorder %s13, 1
    %p140 = por %p138, %p139
    %p141 = scmp.ne.s32.totalorder %s133, %s136
    %p142 = scmp.eq.s32.totalorder %s13, 0
    %p143 = por %p141, %p142
    %p144 = scmp.ne.s32.totalorder %s133, %s136
    %p145 = scmp.eq.s32.totalorder %s18, 1
    %p146 = por %p144, %p145
    %p147 = scmp.ne.s32.totalorder %s136, %s137
    %p148 = scmp.eq.s32.totalorder %s18, 0
    %p149 = por %p147, %p148
    %p150 = scmp.ne.s32.totalorder %s136, %s137
    %p151 = scmp.eq.s32.totalorder %s19, 1
    %p152 = por %p150, %p151
    %p154 = scmp.ne.s32.totalorder %s137, %s153
    %p155 = scmp.eq.s32.totalorder %s19, 0
    %p156 = por %p154, %p155
    %s157 = ssub.s32 %s13, %s20
    %p158 = scmp.eq.s32.totalorder %s157, 0
    %s160 = sadd.s32 %s159, 1
    %s161 = scalar_select %p158, %s159, %s160
    %p164 = pneg %p158
    %p165 = scmp.eq.s32.totalorder %s13, 1
    %p166 = por %p164, %p165
    %p167 = scmp.ne.s32.totalorder %s159, %s162
    %p168 = scmp.eq.s32.totalorder %s13, 0
    %p169 = por %p167, %p168
    %p170 = scmp.ne.s32.totalorder %s159, %s162
    %p171 = scmp.eq.s32.totalorder %s18, 1
    %p172 = por %p170, %p171
    %p173 = scmp.ne.s32.totalorder %s162, %s163
    %p174 = scmp.eq.s32.totalorder %s18, 0
    %p175 = por %p173, %p174
    %p176 = scmp.ne.s32.totalorder %s162, %s163
    %p177 = scmp.eq.s32.totalorder %s19, 1
    %p178 = por %p176, %p177
    %p180 = scmp.ne.s32.totalorder %s163, %s179
    %p181 = scmp.eq.s32.totalorder %s19, 0
    %p182 = por %p180, %p181
    %p183 = scmp.le.s32.totalorder 1, %s13
    %p184 = scmp.lt.s32.totalorder %s13, 3
    %p185 = pnand %p183, %p184
    %p186 = pneg %p185
    // Predicated region
    $region9: #{dense_bottleneck.2} parent=5 // pred_check
      _
    $region10: #{dense_bottleneck.2} parent=5 // pred_check_branch
      %188 = sbr.rel (%p185) target = $region12
    $region11: #{dense_bottleneck.2} parent=5 // pred_region
      %s189 = ssub.s32 %s13, 1
      // Predicated region
      $region13: #{dense_bottleneck.2} parent=11 // pred_check
        %p190 = pneg %p60
      $region14: #{dense_bottleneck.2} parent=11 // pred_check_branch
        %192 = sbr.rel (%p190) target = $region16
      $region15: #{dense_bottleneck.2} parent=11 // pred_region
        _
      $region16: #{dense_bottleneck.2} parent=11 // pred_fallthru
        _
      // Predicated region
      $region17: #{dense_bottleneck.2} parent=11 // pred_check
        %p193 = pneg %p81
      $region18: #{dense_bottleneck.2} parent=11 // pred_check_branch
        %195 = sbr.rel (%p193) target = $region20
      $region19: #{dense_bottleneck.2} parent=11 // pred_region
        _
      $region20: #{dense_bottleneck.2} parent=11 // pred_fallthru
        _
      // Predicated region
      $region21: #{dense_bottleneck.2} parent=11 // pred_check
        %p196 = pneg %p102
      $region22: #{dense_bottleneck.2} parent=11 // pred_check_branch
        %198 = sbr.rel (%p196) target = $region24
      $region23: #{dense_bottleneck.2} parent=11 // pred_region
        _
      $region24: #{dense_bottleneck.2} parent=11 // pred_fallthru
        _
      // Predicated region
      $region25: #{dense_bottleneck.2} parent=11 // pred_check
        %p199 = pneg %p123
      $region26: #{dense_bottleneck.2} parent=11 // pred_check_branch
        %201 = sbr.rel (%p199) target = $region28
      $region27: #{dense_bottleneck.2} parent=11 // pred_region
        _
      $region28: #{dense_bottleneck.2} parent=11 // pred_fallthru
        _
    $region12: #{dense_bottleneck.2} parent=5 // pred_fallthru
      _
    %p202 = scmp.lt.s32.totalorder %s13, 2
    // Predicated region
    $region29: #{dense_bottleneck.2} parent=5 // pred_check
      %p203 = pneg %p202
    $region30: #{dense_bottleneck.2} parent=5 // pred_check_branch
      %205 = sbr.rel (%p203) target = $region32
    $region31: #{dense_bottleneck.2} parent=5 // pred_region
      // Predicated region
      $region33: #{dense_bottleneck.2} parent=31 // pred_check
        %p206 = pneg %p33
      $region34: #{dense_bottleneck.2} parent=31 // pred_check_branch
        %208 = sbr.rel (%p206) target = $region36
      $region35: #{dense_bottleneck.2} parent=31 // pred_region
        %p209 = scmp.lt.s32.totalorder %s13, 1
        %s210 = scalar_select %p209, %s13, 1
        %s211 = smul.addr %s210, 2
        %s212 = smul.addr %s211, 4
        %s213 = scalar_lea.vmem %s0, %s212
      $region36: #{dense_bottleneck.2} parent=31 // pred_fallthru
        _
    $region32: #{dense_bottleneck.2} parent=5 // pred_fallthru
      _
    %p214 = scmp.le.s32.totalorder 1, %s13
    %p215 = scmp.lt.s32.totalorder %s13, 3
    %p216 = pnand %p214, %p215
    %p217 = pneg %p216
    // Predicated region
    $region37: #{dense_bottleneck.2} parent=5 // pred_check
      _
    $region38: #{dense_bottleneck.2} parent=5 // pred_check_branch
      %219 = sbr.rel (%p216) target = $region40
    $region39: #{dense_bottleneck.2} parent=5 // pred_region
      %s220 = ssub.s32 %s13, 1
      %p221 = scmp.lt.s32.totalorder %s18, 1
      %s222 = scalar_select %p221, %s18, 1
      %s223 = smul.addr %s222, 2
      %s224 = smul.addr %s223, 4
      %s225 = scalar_lea.vmem %s0, %s224
      %p226 = pneg %p39
      %p227 = pneg %p36
      %p228 = pneg %p60
      %p229 = pneg %p57
      %p230 = pneg %p81
      %p231 = pneg %p78
      %p232 = pneg %p102
      %p233 = pneg %p99
      %p234 = pneg %p123
      %p235 = pneg %p120
      %p236 = pneg %p149
      %p237 = pneg %p146
      %p238 = scmp.lt.s32.totalorder %s18, 1
      %s239 = scalar_select %p238, %s18, 1
      %s240 = smul.addr %s239, 8
      %s241 = smul.addr %s240, 4
      %s242 = scalar_lea.vmem %s5, %s241
      %p243 = pneg %p175
      %p244 = pneg %p172
      %p245 = scmp.lt.s32.totalorder %s18, 1
      %s246 = scalar_select %p245, %s18, 1
      %s247 = smul.addr %s246, 4
      %s248 = smul.addr %s247, 8
      %s249 = scalar_lea.vmem %s6, %s248
      %p250 = scmp.lt.s32.totalorder %s18, 1
      %s251 = scalar_select %p250, %s18, 1
      %s252 = smul.addr %s251, 2
      %s253 = smul.addr %s252, 4
      %s254 = scalar_lea.vmem %s0, %s253
      %p255 = scmp.lt.s32.totalorder %s18, 1
      %s256 = scalar_select %p255, %s18, 1
      %s257 = smul.addr %s256, 8
      %s258 = smul.addr %s257, 4
      %s259 = scalar_lea.vmem %s5, %s258
      %p260 = scmp.lt.s32.totalorder %s18, 1
      %s261 = scalar_select %p260, %s18, 1
      %s262 = smul.addr %s261, 4
      %s263 = smul.addr %s262, 8
      %s264 = scalar_lea.vmem %s6, %s263
      %v265 = vld [vmem:[%s254] sm:$0xff]
      %v266 = vld [vmem:[%s1] sm:$0xf]
      %268 = vset.pattern.permute.xlu0 0
      %269 = vperm.xlu0 %268, %v266
      %v270 = vpop.permute.xlu0 %269
      %v272 = vunpack.c.l.s4 839922192
      %v273 = vunpack.c.0.s8 %v272
      %v274 = vlaneseq
      %v275 = vshrl.u32 %v274, 7
      %v276 = vsub.s32 %v273, %v275
      %v277 = vrot.slane %v270, %v276
      %v279 = vmul.f32 %v265, %v277
      %v280 = vld [vmem:[%s2] sm:$0xf]
      %282 = vset.pattern.permute.xlu0 0
      %283 = vperm.xlu0 %282, %v280
      %v284 = vpop.permute.xlu0 %283
      %v286 = vunpack.c.l.s4 839922192
      %v287 = vunpack.c.0.s8 %v286
      %v288 = vlaneseq
      %v289 = vshrl.u32 %v288, 7
      %v290 = vsub.s32 %v287, %v289
      %v291 = vrot.slane %v284, %v290
      %v293 = vadd.f32 %v279, %v291
      %v294 = vmax.f32 %v293, 0.0
      %v295 = vld [vmem:[%s3] sm:$0xff]
      %v296 = vld [vmem:[%s3 + $0x8] sm:$0xff]
      %v297 = vld [vmem:[%s3 + $0x10] sm:$0xff]
      %v298 = vld [vmem:[%s3 + $0x18] sm:$0xff]
      %v299 = vld [vmem:[%s4] sm:$0xff]
      %v300 = vld [vmem:[%s4 + $0x8] sm:$0xff]
      %v301 = vld [vmem:[%s4 + $0x10] sm:$0xff]
      %v302 = vld [vmem:[%s4 + $0x18] sm:$0xff]
      %304 = vset.pattern.permute.xlu0 0
      %305 = vperm.xlu0 %304, %v299
      %v306 = vpop.permute.xlu0 %305
      %309 = vset.pattern.permute.xlu0 0
      %310 = vperm.xlu0 %309, %v300
      %v311 = vpop.permute.xlu0 %310
      %314 = vset.pattern.permute.xlu0 0
      %315 = vperm.xlu0 %314, %v301
      %v316 = vpop.permute.xlu0 %315
      %319 = vset.pattern.permute.xlu0 0
      %320 = vperm.xlu0 %319, %v302
      %v321 = vpop.permute.xlu0 %320
      %v324 = vcombine.high %v294, %v294
      %vm325 = vcmask 31744
      %v327 = vsel %vm325, %v295, 0
      %v330 = vsel %vm325, %v296, 0
      %v333 = vsel %vm325, %v297, 0
      %v336 = vsel %vm325, %v298, 0
      %vm338 = vcmask 1043456
      %v339 = vsel %vm338, %v294, 0
      %v341 = vsel %vm338, %v324, 0
      %343 = vmatprep.subr.mxu0 %v341
      %344 = vmatpush1.msra.mxu0 %v339
      %345 = vmatprep.subr.mxu0 0.0
      %346 = vmatpush1.msra.mxu0 0.0
      %347 = vmatprep.subr.mxu0 0.0
      %348 = vmatpush1.msra.mxu0 0.0
      %349 = vmatprep.subr.mxu0 0.0
      %350 = vmatpush1.msra.mxu0 0.0
      %351 = vmatprep.subr.mxu0 0.0
      %352 = vmatpush1.msra.mxu0 0.0
      %353 = vmatprep.subr.mxu0 0.0
      %354 = vmatpush1.msra.mxu0 0.0
      %355 = vmatprep.subr.mxu0 0.0
      %356 = vmatpush1.msra.mxu0 0.0
      %357 = vmatprep.subr.mxu0 0.0
      %358 = vmatpush1.msra.mxu0 0.0
      %359 = vmatprep.subr.mxu0 0.0
      %360 = vmatpush1.msra.mxu0 0.0
      %361 = vmatprep.subr.mxu0 0.0
      %362 = vmatpush1.msra.mxu0 0.0
      %363 = vmatprep.subr.mxu0 0.0
      %364 = vmatpush1.msra.mxu0 0.0
      %365 = vmatprep.subr.mxu0 0.0
      %366 = vmatpush1.msra.mxu0 0.0
      %367 = vmatprep.subr.mxu0 0.0
      %368 = vmatpush1.msra.mxu0 0.0
      %369 = vmatprep.subr.mxu0 0.0
      %370 = vmatpush1.msra.mxu0 0.0
      %371 = vmatprep.subr.mxu0 0.0
      %372 = vmatpush1.msra.mxu0 0.0
      %373 = vmatprep.subr.mxu0 0.0
      %374 = vmatpush1.msra.mxu0 0.0
      %375 = vmatprep.subr.mxu0 0.0
      %376 = vmatpush1.msra.mxu0 0.0
      %377 = vmatprep.subr.mxu0 0.0
      %378 = vmatpush1.msra.mxu0 0.0
      %379 = vmatprep.subr.mxu0 0.0
      %380 = vmatpush1.msra.mxu0 0.0
      %381 = vmatprep.subr.mxu0 0.0
      %382 = vmatpush1.msra.mxu0 0.0
      %383 = vmatprep.subr.mxu0 0.0
      %384 = vmatpush1.msra.mxu0 0.0
      %385 = vmatprep.subr.mxu0 0.0
      %386 = vmatpush1.msra.mxu0 0.0
      %387 = vmatprep.subr.mxu0 0.0
      %388 = vmatpush1.msra.mxu0 0.0
      %389 = vmatprep.subr.mxu0 0.0
      %390 = vmatpush1.msra.mxu0 0.0
      %391 = vmatprep.subr.mxu0 0.0
      %392 = vmatpush1.msra.mxu0 0.0
      %393 = vmatprep.subr.mxu0 0.0
      %394 = vmatpush1.msra.mxu0 0.0
      %395 = vmatprep.subr.mxu0 0.0
      %396 = vmatpush1.msra.mxu0 0.0
      %397 = vmatprep.subr.mxu0 0.0
      %398 = vmatpush1.msra.mxu0 0.0
      %399 = vmatprep.subr.mxu0 0.0
      %400 = vmatpush1.msra.mxu0 0.0
      %401 = vmatprep.subr.mxu0 0.0
      %402 = vmatpush1.msra.mxu0 0.0
      %403 = vmatprep.subr.mxu0 0.0
      %404 = vmatpush1.msra.mxu0 0.0
      %405 = vmatprep.subr.mxu0 0.0
      %406 = vmatpush1.msra.mxu0 0.0
      %407 = vmatprep.mubr.f32.mxu0 0.0
      %408 = vmatmul.mubr.f32.gmra.mrb[0].mxu0 %v327
      %v409 = vpop.f32.mrb[0].mxu0
      %v410 = vadd.f32 %v306, %v409
      %v411 = vpop.f32.mrb[0].mxu0
      %v412 = vadd.f32 %v306, %v411
      %413 = vmatprep.mubr.f32.mxu0 0.0
      %414 = vmatmul.mubr.f32.gmra.mrb[0].mxu0 %v330
      %v415 = vpop.f32.mrb[0].mxu0
      %v416 = vadd.f32 %v311, %v415
      %v417 = vpop.f32.mrb[0].mxu0
      %v418 = vadd.f32 %v311, %v417
      %419 = vmatprep.mubr.f32.mxu0 0.0
      %420 = vmatmul.mubr.f32.gmra.mrb[0].mxu0 %v333
      %v421 = vpop.f32.mrb[0].mxu0
      %v422 = vadd.f32 %v316, %v421
      %v423 = vpop.f32.mrb[0].mxu0
      %v424 = vadd.f32 %v316, %v423
      %425 = vmatprep.mubr.f32.mxu0 0.0
      %426 = vmatmul.mubr.f32.gmra.mrb[0].mxu0 %v336
      %v427 = vpop.f32.mrb[0].mxu0
      %v428 = vadd.f32 %v321, %v427
      %v429 = vpop.f32.mrb[0].mxu0
      %v430 = vadd.f32 %v321, %v429
      %431 = vdwg.mxu0
      %v432 = vpack.c.bf16 %v416, %v410
      %v433 = vpack.c.bf16 %v418, %v412
      %v434 = vpack.c.bf16 %v428, %v422
      %v435 = vpack.c.bf16 %v430, %v424
      %v440 = vunpack.c.l.b16 %v432
      %v441 = vunpack.c.l.b16 %v433
      %v442 = vunpack.c.h.b16 %v432
      %v443 = vunpack.c.h.b16 %v433
      %v444 = vunpack.c.l.b16 %v434
      %v445 = vunpack.c.l.b16 %v435
      %v446 = vunpack.c.h.b16 %v434
      %v447 = vunpack.c.h.b16 %v435
      %v448 = vpack.c.b16 %v441, %v440
      %v449 = vpack.c.b16 %v443, %v442
      %v450 = vpack.c.b16 %v445, %v444
      %v451 = vpack.c.b16 %v447, %v446
      %456 = vst [vmem:[%s259] sm:$0xff] %v448
      %457 = vst [vmem:[%s259 + $0x8] sm:$0xff] %v449
      %458 = vst [vmem:[%s259 + $0x10] sm:$0xff] %v450
      %459 = vst [vmem:[%s259 + $0x18] sm:$0xff] %v451
      %v460 = vadd.f32 %v410, %v412
      %461 = vadd.xlane.f32.xlu0 %v460
      %v462 = vpop.xlane.xlu0 %461
      %v463 = vadd.f32 %v416, %v418
      %464 = vadd.xlane.f32.xlu0 %v463
      %v465 = vpop.xlane.xlu0 %464
      %v466 = vadd.f32 %v422, %v424
      %467 = vadd.xlane.f32.xlu0 %v466
      %v468 = vpop.xlane.xlu0 %467
      %v469 = vadd.f32 %v428, %v430
      %470 = vadd.xlane.f32.xlu0 %v469
      %v471 = vpop.xlane.xlu0 %470
      %v472 = vmul.f32 %v410, %v410
      %v473 = vmul.f32 %v412, %v412
      %v474 = vmul.f32 %v416, %v416
      %v475 = vmul.f32 %v418, %v418
      %v476 = vmul.f32 %v422, %v422
      %v477 = vmul.f32 %v424, %v424
      %v478 = vmul.f32 %v428, %v428
      %v479 = vmul.f32 %v430, %v430
      %v480 = vadd.f32 %v472, %v473
      %481 = vadd.xlane.f32.xlu0 %v480
      %v482 = vpop.xlane.xlu0 %481
      %v483 = vadd.f32 %v474, %v475
      %484 = vadd.xlane.f32.xlu0 %v483
      %v485 = vpop.xlane.xlu0 %484
      %v486 = vadd.f32 %v476, %v477
      %487 = vadd.xlane.f32.xlu0 %v486
      %v488 = vpop.xlane.xlu0 %487
      %v489 = vadd.f32 %v478, %v479
      %490 = vadd.xlane.f32.xlu0 %v489
      %v491 = vpop.xlane.xlu0 %490
      %vm492 = vcmask 7168
      %v493 = vsel %vm492, %v462, %v482
      %v494 = vsel %vm492, %v465, %v485
      %v495 = vsel %vm492, %v468, %v488
      %v496 = vsel %vm492, %v471, %v491
      %vm497 = vcmask 15360
      %498 = vst.msk [vmem:[%s264] sm:$0xff] %vm497, %v493
      %499 = vst.msk [vmem:[%s264 + $0x8] sm:$0xff] %vm497, %v494
      %500 = vst.msk [vmem:[%s264 + $0x10] sm:$0xff] %vm497, %v495
      %501 = vst.msk [vmem:[%s264 + $0x18] sm:$0xff] %vm497, %v496
      %p502 = scmp.lt.s32.totalorder %s18, 1
      %s503 = scalar_select %p502, %s18, 1
      %s504 = smul.addr %s503, 8
      %s505 = smul.addr %s504, 4
      %s506 = scalar_lea.vmem %s5, %s505
      %p507 = scmp.lt.s32.totalorder %s18, 1
      %s508 = scalar_select %p507, %s18, 1
      %s509 = smul.addr %s508, 4
      %s510 = smul.addr %s509, 8
      %s511 = scalar_lea.vmem %s6, %s510
      // Predicated region
      $region41: #{dense_bottleneck.2} parent=39 // pred_check
        %p512 = pneg %p146
      $region42: #{dense_bottleneck.2} parent=39 // pred_check_branch
        %514 = sbr.rel (%p512) target = $region44
      $region43: #{dense_bottleneck.2} parent=39 // pred_region
        _
      $region44: #{dense_bottleneck.2} parent=39 // pred_fallthru
        _
      // Predicated region
      $region45: #{dense_bottleneck.2} parent=39 // pred_check
        %p515 = pneg %p172
      $region46: #{dense_bottleneck.2} parent=39 // pred_check_branch
        %517 = sbr.rel (%p515) target = $region48
      $region47: #{dense_bottleneck.2} parent=39 // pred_region
        _
      $region48: #{dense_bottleneck.2} parent=39 // pred_fallthru
        _
    $region40: #{dense_bottleneck.2} parent=5 // pred_fallthru
      _
    %p518 = scmp.le.s32.totalorder 2, %s13
    // Predicated region
    $region49: #{dense_bottleneck.2} parent=5 // pred_check
      %p519 = pneg %p518
    $region50: #{dense_bottleneck.2} parent=5 // pred_check_branch
      %521 = sbr.rel (%p519) target = $region52
    $region51: #{dense_bottleneck.2} parent=5 // pred_region
      %s522 = ssub.s32 %s13, 2
      // Predicated region
      $region53: #{dense_bottleneck.2} parent=51 // pred_check
        %p523 = pneg %p152
      $region54: #{dense_bottleneck.2} parent=51 // pred_check_branch
        %525 = sbr.rel (%p523) target = $region56
      $region55: #{dense_bottleneck.2} parent=51 // pred_region
        %p526 = scmp.lt.s32.totalorder %s19, 1
        %s527 = scalar_select %p526, %s19, 1
        %s528 = smul.addr %s527, 8
        %s529 = smul.addr %s528, 4
        %s530 = scalar_lea.vmem %s5, %s529
      $region56: #{dense_bottleneck.2} parent=51 // pred_fallthru
        _
      // Predicated region
      $region57: #{dense_bottleneck.2} parent=51 // pred_check
        %p531 = pneg %p178
      $region58: #{dense_bottleneck.2} parent=51 // pred_check_branch
        %533 = sbr.rel (%p531) target = $region60
      $region59: #{dense_bottleneck.2} parent=51 // pred_region
        %p534 = scmp.lt.s32.totalorder %s19, 1
        %s535 = scalar_select %p534, %s19, 1
        %s536 = smul.addr %s535, 4
        %s537 = smul.addr %s536, 8
        %s538 = scalar_lea.vmem %s6, %s537
      $region60: #{dense_bottleneck.2} parent=51 // pred_fallthru
        _
    $region52: #{dense_bottleneck.2} parent=5 // pred_fallthru
      _
  $region6: #{dense_bottleneck.2} parent=0 // loop_footer
    %s17 = sadd.s32 1, %s13
  $region7: #{dense_bottleneck.2} parent=0 // loop_footer_branch
    %12 = sbr.rel target = $region3
  $region8: #{dense_bottleneck.2} parent=0 // loop_exit
    _

// kernel: dense_bottleneck.3
$region0: #{dense_bottleneck.3}
  #allocation0 [shape = 'u32[]', space=smem, size = 0x4, offset = 0x4, fixed_abs, tag = 'smem constant byte address 0x4 - core index']
  #allocation1 [shape = 'u32[144,128]{1,0:T(1,128)}', space=vmem, size = 0x12000, scoped, tag = 'internal scratch']
  %s0 = inlined_call_operand.vmem [shape: bf16[2,32,256], index: 0, kind: input, shape index: {}]
  %s1 = inlined_call_operand.vmem [shape: f32[2,4,256], index: 1, kind: input, shape index: {}]
  %s2 = inlined_call_operand.vmem [shape: f32[32,1], index: 2, kind: input, shape index: {}]
  %s3 = inlined_call_operand.vmem [shape: f32[32,1], index: 3, kind: input, shape index: {}]
  %s4 = inlined_call_operand.vmem [shape: f32[9,256], index: 4, kind: input, shape index: {}]
  %s5 = inlined_call_operand.vmem [shape: bf16[8,288], index: 5, kind: input, shape index: {}]
  %s6 = inlined_call_operand.vmem [shape: f32[8,1], index: 6, kind: input, shape index: {}]
  %s7 = inlined_call_operand.vmem [shape: f32[2,12,256], index: 7, kind: output, shape index: {}]
  %s8 = sld [smem:[#allocation0]]
  $region61: #{dense_bottleneck.3} parent=0
    _
  %s10 = ssub.s32 1, %s8
  %s11 = scalar_select 0, %s10, %s8
  loop: start=0, step=1, limit=4
  $region2: #{dense_bottleneck.3} parent=0 // loop_pre_header
    _
  $region3: #{dense_bottleneck.3} parent=0 // loop_header
    %s13 = sphi 0, %s17
    %p14 = scmp.ge.s32.totalorder %s13, 4
    %s23 = sphi 0, %s25
    %s26 = sphi 0, %s23
    %s27 = sphi 0, %s26
    %s43 = sphi 0, %s27
    %s49 = sphi 0, %s51
    %s52 = sphi 0, %s49
    %s53 = sphi 0, %s52
    %s69 = sphi 0, %s53
    %s73 = sphi 0, %s73
    %s75 = sphi 0, %s73
    %s76 = sphi 0, %s75
    %s90 = sphi 0, %s76
    %s94 = sphi 0, %s94
    %s96 = sphi 0, %s94
    %s97 = sphi 0, %s96
    %s111 = sphi 0, %s97
    %s115 = sphi 0, %s115
    %s117 = sphi 0, %s115
    %s118 = sphi 0, %s117
    %s132 = sphi 0, %s118
    %s136 = sphi 0, %s136
    %s138 = sphi 0, %s136
    %s139 = sphi 0, %s138
    %s153 = sphi 0, %s139
    %s157 = sphi 0, %s157
    %s159 = sphi 0, %s157
    %s160 = sphi 0, %s159
    %s174 = sphi 0, %s160
    %s180 = sphi 0, %s182
    %s183 = sphi 0, %s180
    %s184 = sphi 0, %s183
    %s200 = sphi 0, %s184
  $region4: #{dense_bottleneck.3} parent=0 // loop_header_branch
    %16 = sbr.rel (%p14) target = $region8
  $region5: #{dense_bottleneck.3} parent=0 // loop_body
    %s18 = ssub.s32 %s13, 1
    %s19 = ssub.s32 %s13, 2
    %s20 = sadd.s32 %s13, 1
    %s21 = ssub.s32 %s13, %s20
    %p22 = scmp.eq.s32.totalorder %s21, 0
    %s24 = sadd.s32 %s23, 1
    %s25 = scalar_select %p22, %s23, %s24
    %p28 = pneg %p22
    %p29 = scmp.eq.s32.totalorder %s13, 1
    %p30 = por %p28, %p29
    %p31 = scmp.ne.s32.totalorder %s23, %s26
    %p32 = scmp.eq.s32.totalorder %s13, 0
    %p33 = por %p31, %p32
    %p34 = scmp.ne.s32.totalorder %s23, %s26
    %p35 = scmp.eq.s32.totalorder %s18, 1
    %p36 = por %p34, %p35
    %p37 = scmp.ne.s32.totalorder %s26, %s27
    %p38 = scmp.eq.s32.totalorder %s18, 0
    %p39 = por %p37, %p38
    %p40 = scmp.ne.s32.totalorder %s26, %s27
    %p41 = scmp.eq.s32.totalorder %s19, 1
    %p42 = por %p40, %p41
    %p44 = scmp.ne.s32.totalorder %s27, %s43
    %p45 = scmp.eq.s32.totalorder %s19, 0
    %p46 = por %p44, %p45
    %s47 = ssub.s32 %s13, %s20
    %p48 = scmp.eq.s32.totalorder %s47, 0
    %s50 = sadd.s32 %s49, 1
    %s51 = scalar_select %p48, %s49, %s50
    %p54 = pneg %p48
    %p55 = scmp.eq.s32.totalorder %s13, 1
    %p56 = por %p54, %p55
    %p57 = scmp.ne.s32.totalorder %s49, %s52
    %p58 = scmp.eq.s32.totalorder %s13, 0
    %p59 = por %p57, %p58
    %p60 = scmp.ne.s32.totalorder %s49, %s52
    %p61 = scmp.eq.s32.totalorder %s18, 1
    %p62 = por %p60, %p61
    %p63 = scmp.ne.s32.totalorder %s52, %s53
    %p64 = scmp.eq.s32.totalorder %s18, 0
    %p65 = por %p63, %p64
    %p66 = scmp.ne.s32.totalorder %s52, %s53
    %p67 = scmp.eq.s32.totalorder %s19, 1
    %p68 = por %p66, %p67
    %p70 = scmp.ne.s32.totalorder %s53, %s69
    %p71 = scmp.eq.s32.totalorder %s19, 0
    %p72 = por %p70, %p71
    %s74 = sadd.s32 %s73, 1
    %p77 = scmp.eq.s32.totalorder %s13, 1
    %p78 = scmp.ne.s32.totalorder %s73, %s75
    %p79 = scmp.eq.s32.totalorder %s13, 0
    %p80 = por %p78, %p79
    %p81 = scmp.ne.s32.totalorder %s73, %s75
    %p82 = scmp.eq.s32.totalorder %s18, 1
    %p83 = por %p81, %p82
    %p84 = scmp.ne.s32.totalorder %s75, %s76
    %p85 = scmp.eq.s32.totalorder %s18, 0
    %p86 = por %p84, %p85
    %p87 = scmp.ne.s32.totalorder %s75, %s76
    %p88 = scmp.eq.s32.totalorder %s19, 1
    %p89 = por %p87, %p88
    %p91 = scmp.ne.s32.totalorder %s76, %s90
    %p92 = scmp.eq.s32.totalorder %s19, 0
    %p93 = por %p91, %p92
    %s95 = sadd.s32 %s94, 1
    %p98 = scmp.eq.s32.totalorder %s13, 1
    %p99 = scmp.ne.s32.totalorder %s94, %s96
    %p100 = scmp.eq.s32.totalorder %s13, 0
    %p101 = por %p99, %p100
    %p102 = scmp.ne.s32.totalorder %s94, %s96
    %p103 = scmp.eq.s32.totalorder %s18, 1
    %p104 = por %p102, %p103
    %p105 = scmp.ne.s32.totalorder %s96, %s97
    %p106 = scmp.eq.s32.totalorder %s18, 0
    %p107 = por %p105, %p106
    %p108 = scmp.ne.s32.totalorder %s96, %s97
    %p109 = scmp.eq.s32.totalorder %s19, 1
    %p110 = por %p108, %p109
    %p112 = scmp.ne.s32.totalorder %s97, %s111
    %p113 = scmp.eq.s32.totalorder %s19, 0
    %p114 = por %p112, %p113
    %s116 = sadd.s32 %s115, 1
    %p119 = scmp.eq.s32.totalorder %s13, 1
    %p120 = scmp.ne.s32.totalorder %s115, %s117
    %p121 = scmp.eq.s32.totalorder %s13, 0
    %p122 = por %p120, %p121
    %p123 = scmp.ne.s32.totalorder %s115, %s117
    %p124 = scmp.eq.s32.totalorder %s18, 1
    %p125 = por %p123, %p124
    %p126 = scmp.ne.s32.totalorder %s117, %s118
    %p127 = scmp.eq.s32.totalorder %s18, 0
    %p128 = por %p126, %p127
    %p129 = scmp.ne.s32.totalorder %s117, %s118
    %p130 = scmp.eq.s32.totalorder %s19, 1
    %p131 = por %p129, %p130
    %p133 = scmp.ne.s32.totalorder %s118, %s132
    %p134 = scmp.eq.s32.totalorder %s19, 0
    %p135 = por %p133, %p134
    %s137 = sadd.s32 %s136, 1
    %p140 = scmp.eq.s32.totalorder %s13, 1
    %p141 = scmp.ne.s32.totalorder %s136, %s138
    %p142 = scmp.eq.s32.totalorder %s13, 0
    %p143 = por %p141, %p142
    %p144 = scmp.ne.s32.totalorder %s136, %s138
    %p145 = scmp.eq.s32.totalorder %s18, 1
    %p146 = por %p144, %p145
    %p147 = scmp.ne.s32.totalorder %s138, %s139
    %p148 = scmp.eq.s32.totalorder %s18, 0
    %p149 = por %p147, %p148
    %p150 = scmp.ne.s32.totalorder %s138, %s139
    %p151 = scmp.eq.s32.totalorder %s19, 1
    %p152 = por %p150, %p151
    %p154 = scmp.ne.s32.totalorder %s139, %s153
    %p155 = scmp.eq.s32.totalorder %s19, 0
    %p156 = por %p154, %p155
    %s158 = sadd.s32 %s157, 1
    %p161 = scmp.eq.s32.totalorder %s13, 1
    %p162 = scmp.ne.s32.totalorder %s157, %s159
    %p163 = scmp.eq.s32.totalorder %s13, 0
    %p164 = por %p162, %p163
    %p165 = scmp.ne.s32.totalorder %s157, %s159
    %p166 = scmp.eq.s32.totalorder %s18, 1
    %p167 = por %p165, %p166
    %p168 = scmp.ne.s32.totalorder %s159, %s160
    %p169 = scmp.eq.s32.totalorder %s18, 0
    %p170 = por %p168, %p169
    %p171 = scmp.ne.s32.totalorder %s159, %s160
    %p172 = scmp.eq.s32.totalorder %s19, 1
    %p173 = por %p171, %p172
    %p175 = scmp.ne.s32.totalorder %s160, %s174
    %p176 = scmp.eq.s32.totalorder %s19, 0
    %p177 = por %p175, %p176
    %s178 = ssub.s32 %s13, %s20
    %p179 = scmp.eq.s32.totalorder %s178, 0
    %s181 = sadd.s32 %s180, 1
    %s182 = scalar_select %p179, %s180, %s181
    %p185 = pneg %p179
    %p186 = scmp.eq.s32.totalorder %s13, 1
    %p187 = por %p185, %p186
    %p188 = scmp.ne.s32.totalorder %s180, %s183
    %p189 = scmp.eq.s32.totalorder %s13, 0
    %p190 = por %p188, %p189
    %p191 = scmp.ne.s32.totalorder %s180, %s183
    %p192 = scmp.eq.s32.totalorder %s18, 1
    %p193 = por %p191, %p192
    %p194 = scmp.ne.s32.totalorder %s183, %s184
    %p195 = scmp.eq.s32.totalorder %s18, 0
    %p196 = por %p194, %p195
    %p197 = scmp.ne.s32.totalorder %s183, %s184
    %p198 = scmp.eq.s32.totalorder %s19, 1
    %p199 = por %p197, %p198
    %p201 = scmp.ne.s32.totalorder %s184, %s200
    %p202 = scmp.eq.s32.totalorder %s19, 0
    %p203 = por %p201, %p202
    %p204 = scmp.le.s32.totalorder 1, %s13
    %p205 = scmp.lt.s32.totalorder %s13, 3
    %p206 = pnand %p204, %p205
    %p207 = pneg %p206
    // Predicated region
    $region9: #{dense_bottleneck.3} parent=5 // pred_check
      _
    $region10: #{dense_bottleneck.3} parent=5 // pred_check_branch
      %209 = sbr.rel (%p206) target = $region12
    $region11: #{dense_bottleneck.3} parent=5 // pred_region
      %s210 = ssub.s32 %s13, 1
      // Predicated region
      $region13: #{dense_bottleneck.3} parent=11 // pred_check
        %p211 = pneg %p86
      $region14: #{dense_bottleneck.3} parent=11 // pred_check_branch
        %213 = sbr.rel (%p211) target = $region16
      $region15: #{dense_bottleneck.3} parent=11 // pred_region
        _
      $region16: #{dense_bottleneck.3} parent=11 // pred_fallthru
        _
      // Predicated region
      $region17: #{dense_bottleneck.3} parent=11 // pred_check
        %p214 = pneg %p107
      $region18: #{dense_bottleneck.3} parent=11 // pred_check_branch
        %216 = sbr.rel (%p214) target = $region20
      $region19: #{dense_bottleneck.3} parent=11 // pred_region
        _
      $region20: #{dense_bottleneck.3} parent=11 // pred_fallthru
        _
      // Predicated region
      $region21: #{dense_bottleneck.3} parent=11 // pred_check
        %p217 = pneg %p128
      $region22: #{dense_bottleneck.3} parent=11 // pred_check_branch
        %219 = sbr.rel (%p217) target = $region24
      $region23: #{dense_bottleneck.3} parent=11 // pred_region
        _
      $region24: #{dense_bottleneck.3} parent=11 // pred_fallthru
        _
      // Predicated region
      $region25: #{dense_bottleneck.3} parent=11 // pred_check
        %p220 = pneg %p149
      $region26: #{dense_bottleneck.3} parent=11 // pred_check_branch
        %222 = sbr.rel (%p220) target = $region28
      $region27: #{dense_bottleneck.3} parent=11 // pred_region
        _
      $region28: #{dense_bottleneck.3} parent=11 // pred_fallthru
        _
      // Predicated region
      $region29: #{dense_bottleneck.3} parent=11 // pred_check
        %p223 = pneg %p170
      $region30: #{dense_bottleneck.3} parent=11 // pred_check_branch
        %225 = sbr.rel (%p223) target = $region32
      $region31: #{dense_bottleneck.3} parent=11 // pred_region
        _
      $region32: #{dense_bottleneck.3} parent=11 // pred_fallthru
        _
    $region12: #{dense_bottleneck.3} parent=5 // pred_fallthru
      _
    %p226 = scmp.lt.s32.totalorder %s13, 2
    // Predicated region
    $region33: #{dense_bottleneck.3} parent=5 // pred_check
      %p227 = pneg %p226
    $region34: #{dense_bottleneck.3} parent=5 // pred_check_branch
      %229 = sbr.rel (%p227) target = $region36
    $region35: #{dense_bottleneck.3} parent=5 // pred_region
      // Predicated region
      $region37: #{dense_bottleneck.3} parent=35 // pred_check
        %p230 = pneg %p33
      $region38: #{dense_bottleneck.3} parent=35 // pred_check_branch
        %232 = sbr.rel (%p230) target = $region40
      $region39: #{dense_bottleneck.3} parent=35 // pred_region
        %p233 = scmp.lt.s32.totalorder %s13, 1
        %s234 = scalar_select %p233, %s13, 1
        %s235 = smul.addr %s234, 8
        %s236 = smul.addr %s235, 4
        %s237 = scalar_lea.vmem %s0, %s236
      $region40: #{dense_bottleneck.3} parent=35 // pred_fallthru
        _
      // Predicated region
      $region41: #{dense_bottleneck.3} parent=35 // pred_check
        %p238 = pneg %p59
      $region42: #{dense_bottleneck.3} parent=35 // pred_check_branch
        %240 = sbr.rel (%p238) target = $region44
      $region43: #{dense_bottleneck.3} parent=35 // pred_region
        %p241 = scmp.lt.s32.totalorder %s13, 1
        %s242 = scalar_select %p241, %s13, 1
        %s243 = smul.addr %s242, 2
        %s244 = smul.addr %s243, 4
        %s245 = scalar_lea.vmem %s1, %s244
      $region44: #{dense_bottleneck.3} parent=35 // pred_fallthru
        _
    $region36: #{dense_bottleneck.3} parent=5 // pred_fallthru
      _
    %p246 = scmp.le.s32.totalorder 1, %s13
    %p247 = scmp.lt.s32.totalorder %s13, 3
    %p248 = pnand %p246, %p247
    %p249 = pneg %p248
    // Predicated region
    $region45: #{dense_bottleneck.3} parent=5 // pred_check
      _
    $region46: #{dense_bottleneck.3} parent=5 // pred_check_branch
      %251 = sbr.rel (%p248) target = $region48
    $region47: #{dense_bottleneck.3} parent=5 // pred_region
      %s252 = ssub.s32 %s13, 1
      %p253 = scmp.lt.s32.totalorder %s18, 1
      %s254 = scalar_select %p253, %s18, 1
      %s255 = smul.addr %s254, 8
      %s256 = smul.addr %s255, 4
      %s257 = scalar_lea.vmem %s0, %s256
      %p258 = pneg %p39
      %p259 = pneg %p36
      %p260 = scmp.lt.s32.totalorder %s18, 1
      %s261 = scalar_select %p260, %s18, 1
      %s262 = smul.addr %s261, 2
      %s263 = smul.addr %s262, 4
      %s264 = scalar_lea.vmem %s1, %s263
      %p265 = pneg %p65
      %p266 = pneg %p62
      %p267 = pneg %p86
      %p268 = pneg %p83
      %p269 = pneg %p107
      %p270 = pneg %p104
      %p271 = pneg %p128
      %p272 = pneg %p125
      %p273 = pneg %p149
      %p274 = pneg %p146
      %p275 = pneg %p170
      %p276 = pneg %p167
      %p277 = pneg %p196
      %p278 = pneg %p193
      %p279 = scmp.lt.s32.totalorder %s18, 1
      %s280 = scalar_select %p279, %s18, 1
      %s281 = smul.addr %s280, 4
      %s282 = smul.addr %s281, 8
      %s283 = scalar_lea.vmem %s7, %s282
      %p284 = scmp.lt.s32.totalorder %s18, 1
      %s285 = scalar_select %p284, %s18, 1
      %s286 = smul.addr %s285, 8
      %s287 = smul.addr %s286, 4
      %s288 = scalar_lea.vmem %s0, %s287
      %p289 = scmp.lt.s32.totalorder %s18, 1
      %s290 = scalar_select %p289, %s18, 1
      %s291 = smul.addr %s290, 2
      %s292 = smul.addr %s291, 4
      %s293 = scalar_lea.vmem %s1, %s292
      %p294 = scmp.lt.s32.totalorder %s18, 1
      %s295 = scalar_select %p294, %s18, 1
      %s296 = smul.addr %s295, 4
      %s297 = smul.addr %s296, 8
      %s298 = scalar_lea.vmem %s7, %s297
      %v300 = vld [vmem:[%s288] sm:$0xff]
      %v301 = vld [vmem:[%s288 + $0x8] sm:$0xff]
      %v302 = vld [vmem:[%s288 + $0x10] sm:$0xff]
      %v303 = vld [vmem:[%s288 + $0x18] sm:$0xff]
      %v304 = vunpack.c.l.bf16 %v300
      %v305 = vunpack.c.h.bf16 %v300
      %v306 = vunpack.c.l.bf16 %v301
      %v307 = vunpack.c.h.bf16 %v301
      %v308 = vunpack.c.l.bf16 %v302
      %v309 = vunpack.c.h.bf16 %v302
      %v310 = vunpack.c.l.bf16 %v303
      %v311 = vunpack.c.h.bf16 %v303
      %v312 = vld [vmem:[%s2] sm:$0xff]
      %v313 = vld [vmem:[%s2 + $0x8] sm:$0xff]
      %v314 = vld [vmem:[%s2 + $0x10] sm:$0xff]
      %v315 = vld [vmem:[%s2 + $0x18] sm:$0xff]
      %317 = vset.pattern.permute.xlu0 0
      %318 = vperm.xlu0 %317, %v312
      %v319 = vpop.permute.xlu0 %318
      %322 = vset.pattern.permute.xlu0 0
      %323 = vperm.xlu0 %322, %v313
      %v324 = vpop.permute.xlu0 %323
      %327 = vset.pattern.permute.xlu0 0
      %328 = vperm.xlu0 %327, %v314
      %v329 = vpop.permute.xlu0 %328
      %332 = vset.pattern.permute.xlu0 0
      %333 = vperm.xlu0 %332, %v315
      %v334 = vpop.permute.xlu0 %333
      %v336 = vmul.f32 %v304, %v319
      %v337 = vmul.f32 %v305, %v319
      %v338 = vmul.f32 %v306, %v324
      %v339 = vmul.f32 %v307, %v324
      %v340 = vmul.f32 %v308, %v329
      %v341 = vmul.f32 %v309, %v329
      %v342 = vmul.f32 %v310, %v334
      %v343 = vmul.f32 %v311, %v334
      %v344 = vld [vmem:[%s3] sm:$0xff]
      %v345 = vld [vmem:[%s3 + $0x8] sm:$0xff]
      %v346 = vld [vmem:[%s3 + $0x10] sm:$0xff]
      %v347 = vld [vmem:[%s3 + $0x18] sm:$0xff]
      %349 = vset.pattern.permute.xlu0 0
      %350 = vperm.xlu0 %349, %v344
      %v351 = vpop.permute.xlu0 %350
      %354 = vset.pattern.permute.xlu0 0
      %355 = vperm.xlu0 %354, %v345
      %v356 = vpop.permute.xlu0 %355
      %359 = vset.pattern.permute.xlu0 0
      %360 = vperm.xlu0 %359, %v346
      %v361 = vpop.permute.xlu0 %360
      %364 = vset.pattern.permute.xlu0 0
      %365 = vperm.xlu0 %364, %v347
      %v366 = vpop.permute.xlu0 %365
      %v368 = vadd.f32 %v336, %v351
      %v369 = vadd.f32 %v337, %v351
      %v370 = vadd.f32 %v338, %v356
      %v371 = vadd.f32 %v339, %v356
      %v372 = vadd.f32 %v340, %v361
      %v373 = vadd.f32 %v341, %v361
      %v374 = vadd.f32 %v342, %v366
      %v375 = vadd.f32 %v343, %v366
      %v376 = vmax.f32 %v368, 0.0
      %v377 = vmax.f32 %v369, 0.0
      %v378 = vmax.f32 %v370, 0.0
      %v379 = vmax.f32 %v371, 0.0
      %v380 = vmax.f32 %v372, 0.0
      %v381 = vmax.f32 %v373, 0.0
      %v382 = vmax.f32 %v374, 0.0
      %v383 = vmax.f32 %v375, 0.0
      %v384 = vld [vmem:[%s4] sm:$0xff]
      %v385 = vld [vmem:[%s4 + $0x8] sm:$0xff]
      %v386 = vld [vmem:[%s4 + $0x10] sm:$0x1]
      %v387 = vld [vmem:[%s4 + $0x18] sm:$0x1]
      %388 = vrot.lane.b32.xlu0 %v376, 17
      %v389 = vpop.permute.xlu0 %388
      %390 = vrot.lane.b32.xlu0 %v378, 17
      %v391 = vpop.permute.xlu0 %390
      %392 = vrot.lane.b32.xlu0 %v380, 17
      %v393 = vpop.permute.xlu0 %392
      %394 = vrot.lane.b32.xlu0 %v382, 17
      %v395 = vpop.permute.xlu0 %394
      %396 = vrot.lane.b32.xlu0 %v377, 17
      %v397 = vpop.permute.xlu0 %396
      %398 = vrot.lane.b32.xlu0 %v379, 17
      %v399 = vpop.permute.xlu0 %398
      %400 = vrot.lane.b32.xlu0 %v381, 17
      %v401 = vpop.permute.xlu0 %400
      %402 = vrot.lane.b32.xlu0 %v383, 17
      %v403 = vpop.permute.xlu0 %402
      %v404 = vlaneseq
      %v405 = vand.u32 %v404, 127
      %vm406 = vcmp.lt.s32.totalorder %v405, 17
      %v407 = vsel %vm406, %v389, %v397
      %v408 = vsel %vm406, %v391, %v399
      %v409 = vsel %vm406, %v393, %v401
      %v410 = vsel %vm406, %v395, %v403
      %v411 = vsel %vm406, %v397, %v389
      %v412 = vsel %vm406, %v399, %v391
      %v413 = vsel %vm406, %v401, %v393
      %v414 = vsel %vm406, %v403, %v395
      %v415 = vlaneseq
      %v416 = vshrl.u32 %v415, 7
      %v417 = vsub.s32 0, %v416
      %v418 = vrot.slane %v384, %v417
      %v419 = vlaneseq
      %v420 = vshrl.u32 %v419, 7
      %v421 = vsub.s32 0, %v420
      %v422 = vrot.slane %v385, %v421
      %v423 = vmul.f32 %v411, %v418
      %v424 = vmul.f32 %v407, %v422
      %v425 = vmul.f32 %v412, %v418
      %v426 = vmul.f32 %v408, %v422
      %v427 = vmul.f32 %v413, %v418
      %v428 = vmul.f32 %v409, %v422
      %v429 = vmul.f32 %v414, %v418
      %v430 = vmul.f32 %v410, %v422
      %v431 = vpack.c.bf16 %v425, %v423
      %v432 = vpack.c.bf16 %v426, %v424
      %v433 = vpack.c.bf16 %v429, %v427
      %v434 = vpack.c.bf16 %v430, %v428
      %435 = vrot.lane.b32.xlu0 %v376, 16
      %v436 = vpop.permute.xlu0 %435
      %437 = vrot.lane.b32.xlu0 %v378, 16
      %v438 = vpop.permute.xlu0 %437
      %439 = vrot.lane.b32.xlu0 %v380, 16
      %v440 = vpop.permute.xlu0 %439
      %441 = vrot.lane.b32.xlu0 %v382, 16
      %v442 = vpop.permute.xlu0 %441
      %443 = vrot.lane.b32.xlu0 %v377, 16
      %v444 = vpop.permute.xlu0 %443
      %445 = vrot.lane.b32.xlu0 %v379, 16
      %v446 = vpop.permute.xlu0 %445
      %447 = vrot.lane.b32.xlu0 %v381, 16
      %v448 = vpop.permute.xlu0 %447
      %449 = vrot.lane.b32.xlu0 %v383, 16
      %v450 = vpop.permute.xlu0 %449
      %vm451 = vcmp.lt.s32.totalorder %v405, 16
      %v452 = vsel %vm451, %v436, %v444
      %v453 = vsel %vm451, %v438, %v446
      %v454 = vsel %vm451, %v440, %v448
      %v455 = vsel %vm451, %v442, %v450
      %v456 = vsel %vm451, %v444, %v436
      %v457 = vsel %vm451, %v446, %v438
      %v458 = vsel %vm451, %v448, %v440
      %v459 = vsel %vm451, %v450, %v442
      %v460 = vlaneseq
      %v461 = vshrl.u32 %v460, 7
      %v462 = vsub.s32 1, %v461
      %v463 = vrot.slane %v384, %v462
      %v464 = vlaneseq
      %v465 = vshrl.u32 %v464, 7
      %v466 = vsub.s32 1, %v465
      %v467 = vrot.slane %v385, %v466
      %v468 = vmul.f32 %v456, %v463
      %v469 = vmul.f32 %v452, %v467
      %v470 = vmul.f32 %v457, %v463
      %v471 = vmul.f32 %v453, %v467
      %v472 = vmul.f32 %v458, %v463
      %v473 = vmul.f32 %v454, %v467
      %v474 = vmul.f32 %v459, %v463
      %v475 = vmul.f32 %v455, %v467
      %v476 = vpack.c.bf16 %v470, %v468
      %v477 = vpack.c.bf16 %v471, %v469
      %v478 = vpack.c.bf16 %v474, %v472
      %v479 = vpack.c.bf16 %v475, %v473
      %480 = vrot.lane.b32.xlu0 %v376, 15
      %v481 = vpop.permute.xlu0 %480
      %482 = vrot.lane.b32.xlu0 %v378, 15
      %v483 = vpop.permute.xlu0 %482
      %484 = vrot.lane.b32.xlu0 %v380, 15
      %v485 = vpop.permute.xlu0 %484
      %486 = vrot.lane.b32.xlu0 %v382, 15
      %v487 = vpop.permute.xlu0 %486
      %488 = vrot.lane.b32.xlu0 %v377, 15
      %v489 = vpop.permute.xlu0 %488
      %490 = vrot.lane.b32.xlu0 %v379, 15
      %v491 = vpop.permute.xlu0 %490
      %492 = vrot.lane.b32.xlu0 %v381, 15
      %v493 = vpop.permute.xlu0 %492
      %494 = vrot.lane.b32.xlu0 %v383, 15
      %v495 = vpop.permute.xlu0 %494
      %vm496 = vcmp.lt.s32.totalorder %v405, 15
      %v497 = vsel %vm496, %v481, %v489
      %v498 = vsel %vm496, %v483, %v491
      %v499 = vsel %vm496, %v485, %v493
      %v500 = vsel %vm496, %v487, %v495
      %v501 = vsel %vm496, %v489, %v481
      %v502 = vsel %vm496, %v491, %v483
      %v503 = vsel %vm496, %v493, %v485
      %v504 = vsel %vm496, %v495, %v487
      %v505 = vlaneseq
      %v506 = vshrl.u32 %v505, 7
      %v507 = vsub.s32 2, %v506
      %v508 = vrot.slane %v384, %v507
      %v509 = vlaneseq
      %v510 = vshrl.u32 %v509, 7
      %v511 = vsub.s32 2, %v510
      %v512 = vrot.slane %v385, %v511
      %v513 = vmul.f32 %v501, %v508
      %v514 = vmul.f32 %v497, %v512
      %v515 = vmul.f32 %v502, %v508
      %v516 = vmul.f32 %v498, %v512
      %v517 = vmul.f32 %v503, %v508
      %v518 = vmul.f32 %v499, %v512
      %v519 = vmul.f32 %v504, %v508
      %v520 = vmul.f32 %v500, %v512
      %v521 = vpack.c.bf16 %v515, %v513
      %v522 = vpack.c.bf16 %v516, %v514
      %v523 = vpack.c.bf16 %v519, %v517
      %v524 = vpack.c.bf16 %v520, %v518
      %525 = vrot.lane.b32.xlu0 %v376, 1
      %v526 = vpop.permute.xlu0 %525
      %527 = vrot.lane.b32.xlu0 %v378, 1
      %v528 = vpop.permute.xlu0 %527
      %529 = vrot.lane.b32.xlu0 %v380, 1
      %v530 = vpop.permute.xlu0 %529
      %531 = vrot.lane.b32.xlu0 %v382, 1
      %v532 = vpop.permute.xlu0 %531
      %533 = vrot.lane.b32.xlu0 %v377, 1
      %v534 = vpop.permute.xlu0 %533
      %535 = vrot.lane.b32.xlu0 %v379, 1
      %v536 = vpop.permute.xlu0 %535
      %537 = vrot.lane.b32.xlu0 %v381, 1
      %v538 = vpop.permute.xlu0 %537
      %539 = vrot.lane.b32.xlu0 %v383, 1
      %v540 = vpop.permute.xlu0 %539
      %vm541 = vcmp.lt.s32.totalorder %v405, 1
      %v542 = vsel %vm541, %v526, %v534
      %v543 = vsel %vm541, %v528, %v536
      %v544 = vsel %vm541, %v530, %v538
      %v545 = vsel %vm541, %v532, %v540
      %v546 = vsel %vm541, %v534, %v526
      %v547 = vsel %vm541, %v536, %v528
      %v548 = vsel %vm541, %v538, %v530
      %v549 = vsel %vm541, %v540, %v532
      %v550 = vlaneseq
      %v551 = vshrl.u32 %v550, 7
      %v552 = vsub.s32 3, %v551
      %v553 = vrot.slane %v384, %v552
      %v554 = vlaneseq
      %v555 = vshrl.u32 %v554, 7
      %v556 = vsub.s32 3, %v555
      %v557 = vrot.slane %v385, %v556
      %v558 = vmul.f32 %v546, %v553
      %v559 = vmul.f32 %v542, %v557
      %v560 = vmul.f32 %v547, %v553
      %v561 = vmul.f32 %v543, %v557
      %v562 = vmul.f32 %v548, %v553
      %v563 = vmul.f32 %v544, %v557
      %v564 = vmul.f32 %v549, %v553
      %v565 = vmul.f32 %v545, %v557
      %v566 = vpack.c.bf16 %v560, %v558
      %v567 = vpack.c.bf16 %v561, %v559
      %v568 = vpack.c.bf16 %v564, %v562
      %v569 = vpack.c.bf16 %v565, %v563
      %v570 = vlaneseq
      %v571 = vshrl.u32 %v570, 7
      %v572 = vsub.s32 4, %v571
      %v573 = vrot.slane %v384, %v572
      %v574 = vlaneseq
      %v575 = vshrl.u32 %v574, 7
      %v576 = vsub.s32 4, %v575
      %v577 = vrot.slane %v385, %v576
      %v578 = vmul.f32 %v376, %v573
      %v579 = vmul.f32 %v377, %v577
      %v580 = vmul.f32 %v378, %v573
      %v581 = vmul.f32 %v379, %v577
      %v582 = vmul.f32 %v380, %v573
      %v583 = vmul.f32 %v381, %v577
      %v584 = vmul.f32 %v382, %v573
      %v585 = vmul.f32 %v383, %v577
      %v586 = vpack.c.bf16 %v580, %v578
      %v587 = vpack.c.bf16 %v581, %v579
      %v588 = vpack.c.bf16 %v584, %v582
      %v589 = vpack.c.bf16 %v585, %v583
      %590 = vrot.lane.b32.xlu0 %v376, 127
      %v591 = vpop.permute.xlu0 %590
      %592 = vrot.lane.b32.xlu0 %v378, 127
      %v593 = vpop.permute.xlu0 %592
      %594 = vrot.lane.b32.xlu0 %v380, 127
      %v595 = vpop.permute.xlu0 %594
      %596 = vrot.lane.b32.xlu0 %v382, 127
      %v597 = vpop.permute.xlu0 %596
      %598 = vrot.lane.b32.xlu0 %v377, 127
      %v599 = vpop.permute.xlu0 %598
      %600 = vrot.lane.b32.xlu0 %v379, 127
      %v601 = vpop.permute.xlu0 %600
      %602 = vrot.lane.b32.xlu0 %v381, 127
      %v603 = vpop.permute.xlu0 %602
      %604 = vrot.lane.b32.xlu0 %v383, 127
      %v605 = vpop.permute.xlu0 %604
      %vm606 = vcmp.lt.s32.totalorder %v405, 127
      %v607 = vsel %vm606, %v591, %v599
      %v608 = vsel %vm606, %v593, %v601
      %v609 = vsel %vm606, %v595, %v603
      %v610 = vsel %vm606, %v597, %v605
      %v611 = vsel %vm606, %v599, %v591
      %v612 = vsel %vm606, %v601, %v593
      %v613 = vsel %vm606, %v603, %v595
      %v614 = vsel %vm606, %v605, %v597
      %v615 = vlaneseq
      %v616 = vshrl.u32 %v615, 7
      %v617 = vsub.s32 5, %v616
      %v618 = vrot.slane %v384, %v617
      %v619 = vlaneseq
      %v620 = vshrl.u32 %v619, 7
      %v621 = vsub.s32 5, %v620
      %v622 = vrot.slane %v385, %v621
      %v623 = vmul.f32 %v607, %v618
      %v624 = vmul.f32 %v611, %v622
      %v625 = vmul.f32 %v608, %v618
      %v626 = vmul.f32 %v612, %v622
      %v627 = vmul.f32 %v609, %v618
      %v628 = vmul.f32 %v613, %v622
      %v629 = vmul.f32 %v610, %v618
      %v630 = vmul.f32 %v614, %v622
      %v631 = vpack.c.bf16 %v625, %v623
      %v632 = vpack.c.bf16 %v626, %v624
      %v633 = vpack.c.bf16 %v629, %v627
      %v634 = vpack.c.bf16 %v630, %v628
      %635 = vrot.lane.b32.xlu0 %v376, 113
      %v636 = vpop.permute.xlu0 %635
      %637 = vrot.lane.b32.xlu0 %v378, 113
      %v638 = vpop.permute.xlu0 %637
      %639 = vrot.lane.b32.xlu0 %v380, 113
      %v640 = vpop.permute.xlu0 %639
      %641 = vrot.lane.b32.xlu0 %v382, 113
      %v642 = vpop.permute.xlu0 %641
      %643 = vrot.lane.b32.xlu0 %v377, 113
      %v644 = vpop.permute.xlu0 %643
      %645 = vrot.lane.b32.xlu0 %v379, 113
      %v646 = vpop.permute.xlu0 %645
      %647 = vrot.lane.b32.xlu0 %v381, 113
      %v648 = vpop.permute.xlu0 %647
      %649 = vrot.lane.b32.xlu0 %v383, 113
      %v650 = vpop.permute.xlu0 %649
      %vm651 = vcmp.lt.s32.totalorder %v405, 113
      %v652 = vsel %vm651, %v636, %v644
      %v653 = vsel %vm651, %v638, %v646
      %v654 = vsel %vm651, %v640, %v648
      %v655 = vsel %vm651, %v642, %v650
      %v656 = vsel %vm651, %v644, %v636
      %v657 = vsel %vm651, %v646, %v638
      %v658 = vsel %vm651, %v648, %v640
      %v659 = vsel %vm651, %v650, %v642
      %v660 = vlaneseq
      %v661 = vshrl.u32 %v660, 7
      %v662 = vsub.s32 6, %v661
      %v663 = vrot.slane %v384, %v662
      %v664 = vlaneseq
      %v665 = vshrl.u32 %v664, 7
      %v666 = vsub.s32 6, %v665
      %v667 = vrot.slane %v385, %v666
      %v668 = vmul.f32 %v652, %v663
      %v669 = vmul.f32 %v656, %v667
      %v670 = vmul.f32 %v653, %v663
      %v671 = vmul.f32 %v657, %v667
      %v672 = vmul.f32 %v654, %v663
      %v673 = vmul.f32 %v658, %v667
      %v674 = vmul.f32 %v655, %v663
      %v675 = vmul.f32 %v659, %v667
      %v676 = vpack.c.bf16 %v670, %v668
      %v677 = vpack.c.bf16 %v671, %v669
      %v678 = vpack.c.bf16 %v674, %v672
      %v679 = vpack.c.bf16 %v675, %v673
      %680 = vrot.lane.b32.xlu0 %v376, 112
      %v681 = vpop.permute.xlu0 %680
      %682 = vrot.lane.b32.xlu0 %v378, 112
      %v683 = vpop.permute.xlu0 %682
      %684 = vrot.lane.b32.xlu0 %v380, 112
      %v685 = vpop.permute.xlu0 %684
      %686 = vrot.lane.b32.xlu0 %v382, 112
      %v687 = vpop.permute.xlu0 %686
      %688 = vrot.lane.b32.xlu0 %v377, 112
      %v689 = vpop.permute.xlu0 %688
      %690 = vrot.lane.b32.xlu0 %v379, 112
      %v691 = vpop.permute.xlu0 %690
      %692 = vrot.lane.b32.xlu0 %v381, 112
      %v693 = vpop.permute.xlu0 %692
      %694 = vrot.lane.b32.xlu0 %v383, 112
      %v695 = vpop.permute.xlu0 %694
      %vm696 = vcmp.lt.s32.totalorder %v405, 112
      %v697 = vsel %vm696, %v681, %v689
      %v698 = vsel %vm696, %v683, %v691
      %v699 = vsel %vm696, %v685, %v693
      %v700 = vsel %vm696, %v687, %v695
      %v701 = vsel %vm696, %v689, %v681
      %v702 = vsel %vm696, %v691, %v683
      %v703 = vsel %vm696, %v693, %v685
      %v704 = vsel %vm696, %v695, %v687
      %v705 = vlaneseq
      %v706 = vshrl.u32 %v705, 7
      %v707 = vsub.s32 7, %v706
      %v708 = vrot.slane %v384, %v707
      %v709 = vlaneseq
      %v710 = vshrl.u32 %v709, 7
      %v711 = vsub.s32 7, %v710
      %v712 = vrot.slane %v385, %v711
      %v713 = vmul.f32 %v697, %v708
      %v714 = vmul.f32 %v701, %v712
      %v715 = vmul.f32 %v698, %v708
      %v716 = vmul.f32 %v702, %v712
      %v717 = vmul.f32 %v699, %v708
      %v718 = vmul.f32 %v703, %v712
      %v719 = vmul.f32 %v700, %v708
      %v720 = vmul.f32 %v704, %v712
      %v721 = vpack.c.bf16 %v715, %v713
      %v722 = vpack.c.bf16 %v716, %v714
      %v723 = vpack.c.bf16 %v719, %v717
      %v724 = vpack.c.bf16 %v720, %v718
      %725 = vrot.lane.b32.xlu0 %v376, 111
      %v726 = vpop.permute.xlu0 %725
      %727 = vrot.lane.b32.xlu0 %v378, 111
      %v728 = vpop.permute.xlu0 %727
      %729 = vrot.lane.b32.xlu0 %v380, 111
      %v730 = vpop.permute.xlu0 %729
      %731 = vrot.lane.b32.xlu0 %v382, 111
      %v732 = vpop.permute.xlu0 %731
      %733 = vrot.lane.b32.xlu0 %v377, 111
      %v734 = vpop.permute.xlu0 %733
      %735 = vrot.lane.b32.xlu0 %v379, 111
      %v736 = vpop.permute.xlu0 %735
      %737 = vrot.lane.b32.xlu0 %v381, 111
      %v738 = vpop.permute.xlu0 %737
      %739 = vrot.lane.b32.xlu0 %v383, 111
      %v740 = vpop.permute.xlu0 %739
      %vm741 = vcmp.lt.s32.totalorder %v405, 111
      %v742 = vsel %vm741, %v726, %v734
      %v743 = vsel %vm741, %v728, %v736
      %v744 = vsel %vm741, %v730, %v738
      %v745 = vsel %vm741, %v732, %v740
      %v746 = vsel %vm741, %v734, %v726
      %v747 = vsel %vm741, %v736, %v728
      %v748 = vsel %vm741, %v738, %v730
      %v749 = vsel %vm741, %v740, %v732
      %v750 = vlaneseq
      %v751 = vshrl.u32 %v750, 7
      %v752 = vsub.s32 0, %v751
      %v753 = vrot.slane %v386, %v752
      %v754 = vlaneseq
      %v755 = vshrl.u32 %v754, 7
      %v756 = vsub.s32 0, %v755
      %v757 = vrot.slane %v387, %v756
      %v758 = vmul.f32 %v742, %v753
      %v759 = vmul.f32 %v746, %v757
      %v760 = vmul.f32 %v743, %v753
      %v761 = vmul.f32 %v747, %v757
      %v762 = vmul.f32 %v744, %v753
      %v763 = vmul.f32 %v748, %v757
      %v764 = vmul.f32 %v745, %v753
      %v765 = vmul.f32 %v749, %v757
      %v766 = vpack.c.bf16 %v760, %v758
      %v767 = vpack.c.bf16 %v761, %v759
      %v768 = vpack.c.bf16 %v764, %v762
      %v769 = vpack.c.bf16 %v765, %v763
      %v770 = vld [vmem:[%s5] sm:$0xff]
      %v771 = vld [vmem:[%s5 + $0x8] sm:$0xf]
      %v772 = vld [vmem:[%s6] sm:$0xff]
      %774 = vset.pattern.permute.xlu0 0
      %775 = vperm.xlu0 %774, %v772
      %v776 = vpop.permute.xlu0 %775
      %v780 = vunpack.c.l.b16 %v770
      %v781 = vunpack.c.h.b16 %v770
      %v782 = vunpack.c.l.b16 %v771
      %v783 = vpack.c.b16 %v780, %v780
      %v784 = vpack.c.b16 %v781, %v781
      %v785 = vpack.c.b16 %v782, %v782
      %vm788 = vcmask 261120
      %v790 = vsel %vm788, %v785, 0
      %792 = vmatprep.subr.bf16.mxu0 %v432
      %793 = vmatpush1.bf16.msra.mxu0 %v431
      %794 = vmatprep.subr.bf16.mxu0 %v434
      %795 = vmatpush1.bf16.msra.mxu0 %v433
      %796 = vmatprep.subr.bf16.mxu0 %v477
      %797 = vmatpush1.bf16.msra.mxu0 %v476
      %798 = vmatprep.subr.bf16.mxu0 %v479
      %799 = vmatpush1.bf16.msra.mxu0 %v478
      %800 = vmatprep.subr.bf16.mxu0 %v522
      %801 = vmatpush1.bf16.msra.mxu0 %v521
      %802 = vmatprep.subr.bf16.mxu0 %v524
      %803 = vmatpush1.bf16.msra.mxu0 %v523
      %804 = vmatprep.subr.bf16.mxu0 %v567
      %805 = vmatpush1.bf16.msra.mxu0 %v566
      %806 = vmatprep.subr.bf16.mxu0 %v569
      %807 = vmatpush1.bf16.msra.mxu0 %v568
      %808 = vmatprep.subr.bf16.mxu0 %v587
      %809 = vmatpush1.bf16.msra.mxu0 %v586
      %810 = vmatprep.subr.bf16.mxu0 %v589
      %811 = vmatpush1.bf16.msra.mxu0 %v588
      %812 = vmatprep.subr.bf16.mxu0 %v632
      %813 = vmatpush1.bf16.msra.mxu0 %v631
      %814 = vmatprep.subr.bf16.mxu0 %v634
      %815 = vmatpush1.bf16.msra.mxu0 %v633
      %816 = vmatprep.subr.bf16.mxu0 %v677
      %817 = vmatpush1.bf16.msra.mxu0 %v676
      %818 = vmatprep.subr.bf16.mxu0 %v679
      %819 = vmatpush1.bf16.msra.mxu0 %v678
      %820 = vmatprep.subr.bf16.mxu0 %v722
      %821 = vmatpush1.bf16.msra.mxu0 %v721
      %822 = vmatprep.subr.bf16.mxu0 %v724
      %823 = vmatpush1.bf16.msra.mxu0 %v723
      %824 = vmatprep.mubr.bf16.mxu0 %v784
      %825 = vmatmul.mubr.bf16.gmra.mrb[0].mxu0 %v783
      %v826 = vpop.f32.mrb[0].mxu0
      %v827 = vadd.f32 %v776, %v826
      %v828 = vpop.f32.mrb[0].mxu0
      %v829 = vadd.f32 %v776, %v828
      %v830 = vpop.f32.mrb[0].mxu0
      %v831 = vpop.f32.mrb[0].mxu0
      %832 = vdwg.mxu0
      %833 = vmatprep.subr.bf16.mxu0 %v767
      %834 = vmatpush1.bf16.msra.mxu0 %v766
      %835 = vmatprep.subr.bf16.mxu0 %v769
      %836 = vmatpush1.bf16.msra.mxu0 %v768
      %837 = vmatprep.subr.bf16.mxu0 0
      %838 = vmatpush1.bf16.msra.mxu0 0
      %839 = vmatprep.subr.bf16.mxu0 0
      %840 = vmatpush1.bf16.msra.mxu0 0
      %841 = vmatprep.subr.bf16.mxu0 0
      %842 = vmatpush1.bf16.msra.mxu0 0
      %843 = vmatprep.subr.bf16.mxu0 0
      %844 = vmatpush1.bf16.msra.mxu0 0
      %845 = vmatprep.subr.bf16.mxu0 0
      %846 = vmatpush1.bf16.msra.mxu0 0
      %847 = vmatprep.subr.bf16.mxu0 0
      %848 = vmatpush1.bf16.msra.mxu0 0
      %849 = vmatprep.subr.bf16.mxu0 0
      %850 = vmatpush1.bf16.msra.mxu0 0
      %851 = vmatprep.subr.bf16.mxu0 0
      %852 = vmatpush1.bf16.msra.mxu0 0
      %853 = vmatprep.subr.bf16.mxu0 0
      %854 = vmatpush1.bf16.msra.mxu0 0
      %855 = vmatprep.subr.bf16.mxu0 0
      %856 = vmatpush1.bf16.msra.mxu0 0
      %857 = vmatprep.subr.bf16.mxu0 0
      %858 = vmatpush1.bf16.msra.mxu0 0
      %859 = vmatprep.subr.bf16.mxu0 0
      %860 = vmatpush1.bf16.msra.mxu0 0
      %861 = vmatprep.subr.bf16.mxu0 0
      %862 = vmatpush1.bf16.msra.mxu0 0
      %863 = vmatprep.subr.bf16.mxu0 0
      %864 = vmatpush1.bf16.msra.mxu0 0
      %865 = vmatprep.mubr.bf16.mxu0 0
      %866 = vmatmul.mubr.bf16.gmra.mrb[0].mxu0 %v790
      %v867 = vpop.f32.mrb[0].mxu0
      %v868 = vadd.f32 %v827, %v867
      %v869 = vpop.f32.mrb[0].mxu0
      %v870 = vadd.f32 %v829, %v869
      %v871 = vpop.f32.mrb[0].mxu0
      %v872 = vpop.f32.mrb[0].mxu0
      %873 = vdwg.mxu0
      %874 = vst [vmem:[%s298] sm:$0xff] %v868
      %875 = vst [vmem:[%s298 + $0x8] sm:$0xff] %v870
      %v876 = vld [vmem:[%s293] sm:$0xff]
      %v878 = vcombine.high %v876, %v876
      %880 = vst [vmem:[%s298 + $0x10] sm:$0xf] %v876
      %881 = vst [vmem:[%s298 + $0x18] sm:$0xf] %v878
      %p882 = scmp.lt.s32.totalorder %s18, 1
      %s883 = scalar_select %p882, %s18, 1
      %s884 = smul.addr %s883, 4
      %s885 = smul.addr %s884, 8
      %s886 = scalar_lea.vmem %s7, %s885
      // Predicated region
      $region49: #{dense_bottleneck.3} parent=47 // pred_check
        %p887 = pneg %p193
      $region50: #{dense_bottleneck.3} parent=47 // pred_check_branch
        %889 = sbr.rel (%p887) target = $region52
      $region51: #{dense_bottleneck.3} parent=47 // pred_region
        _
      $region52: #{dense_bottleneck.3} parent=47 // pred_fallthru
        _
    $region48: #{dense_bottleneck.3} parent=5 // pred_fallthru
      _
    %p890 = scmp.le.s32.totalorder 2, %s13
    // Predicated region
    $region53: #{dense_bottleneck.3} parent=5 // pred_check
      %p891 = pneg %p890
    $region54: #{dense_bottleneck.3} parent=5 // pred_check_branch
      %893 = sbr.rel (%p891) target = $region56
    $region55: #{dense_bottleneck.3} parent=5 // pred_region
      %s894 = ssub.s32 %s13, 2
      // Predicated region
      $region57: #{dense_bottleneck.3} parent=55 // pred_check
        %p895 = pneg %p199
      $region58: #{dense_bottleneck.3} parent=55 // pred_check_branch
        %897 = sbr.rel (%p895) target = $region60
      $region59: #{dense_bottleneck.3} parent=55 // pred_region
        %p898 = scmp.lt.s32.totalorder %s19, 1
        %s899 = scalar_select %p898, %s19, 1
        %s900 = smul.addr %s899, 4
        %s901 = smul.addr %s900, 8
        %s902 = scalar_lea.vmem %s7, %s901
      $region60: #{dense_bottleneck.3} parent=55 // pred_fallthru
        _
    $region56: #{dense_bottleneck.3} parent=5 // pred_fallthru
      _
  $region6: #{dense_bottleneck.3} parent=0 // loop_footer
    %s17 = sadd.s32 1, %s13
  $region7: #{dense_bottleneck.3} parent=0 // loop_footer_branch
    %12 = sbr.rel target = $region3
  $region8: #{dense_bottleneck.3} parent=0 // loop_exit
    _

</llo_original>
